<compile_context>
chip_gen: v5e
topology: v5e:2x2
jax: 0.10.0
libtpu: 0.0.40
codegen_flags: <defaults>
</compile_context>

<pallas_src>
import functools

import jax
import jax.numpy as jnp
from jax.experimental import pallas as pl
from jax.experimental.pallas import tpu as pltpu


# ------------------------- in-kernel helpers -------------------------------

def _layer_norm(x, gamma, beta, eps=1e-5):
    # x: (R, H); gamma/beta: (1, H)  -- PyTorch LayerNorm (biased variance)
    mu = jnp.mean(x, axis=-1, keepdims=True)
    var = jnp.mean((x - mu) ** 2, axis=-1, keepdims=True)
    return (x - mu) * jax.lax.rsqrt(var + eps) * gamma + beta


# ------------------------------ kernel --------------------------------------

def poi_transformer_kernel(
    x_ref,                       # (bb, N, H)   f32
    ln1_g_ref, ln1_b_ref,        # (L, H)       f32
    wqkv_ref,                    # (L, H, 3H)   matmul_dtype (scale folded into q)
    proj_w_ref, proj_b_ref,      # (L, H, H) matmul_dtype, (L, H) f32
    ln2_g_ref, ln2_b_ref,        # (L, H)       f32
    fc1_w_ref, fc1_b_ref,        # (L, H, M) matmul_dtype, (L, M) f32
    fc2_w_ref, fc2_b_ref,        # (L, M, H) matmul_dtype, (L, H) f32
    nf_g_ref, nf_b_ref,          # (1, H)       f32
    fine_w_ref, fine_b_ref,      # (H, 3) matmul_dtype, (1, 3) f32
    out_ref,                     # (bb, N, 3)   f32
    *, num_layers, num_heads, matmul_dtype, gelu_approximate,
):
    bb, N, H = x_ref.shape
    R = bb * N                       # fused (batch_block * tokens) row dim
    nh = num_heads
    d = H // nh

    def mm(a, w_c):
        # Tall 2-D matmul on the MXU.  Weights are already matmul_dtype;
        # the activation is cast exactly once per call site; f32 accumulation.
        return jnp.dot(a.astype(matmul_dtype), w_c,
                       preferred_element_type=jnp.float32)

    def bmm(eq, a_c, b_c):
        # Single-leading-batch-dim contraction (known-good Mosaic pattern).
        return jnp.einsum(eq, a_c, b_c, preferred_element_type=jnp.float32)

    x = x_ref[...].astype(jnp.float32).reshape(R, H)

    for l in range(num_layers):
        # ---------------- pre-norm multi-head self-attention ----------------
        h1 = _layer_norm(x, ln1_g_ref[l:l + 1, :], ln1_b_ref[l:l + 1, :])
        qkv = mm(h1, wqkv_ref[l]).reshape(bb, N, 3 * H)      # (bb, N, 3H) f32

        # Stack heads on the leading (einsum-batch) axis -> (nh*bb, N, d);
        # one hoisted cast per tensor, nothing re-cast per head.
        qh = jnp.concatenate(
            [qkv[:, :, hh * d:(hh + 1) * d] for hh in range(nh)],
            axis=0).astype(matmul_dtype)
        kh = jnp.concatenate(
            [qkv[:, :, H + hh * d:H + (hh + 1) * d] for hh in range(nh)],
            axis=0).astype(matmul_dtype)
        vh = jnp.concatenate(
            [qkv[:, :, 2 * H + hh * d:2 * H + (hh + 1) * d] for hh in range(nh)],
            axis=0).astype(matmul_dtype)

        # One score einsum + one softmax + one PV einsum per layer
        # (1/sqrt(d) already folded into the q weight in the wrapper).
        s = bmm("bqd,bkd->bqk", qh, kh)                      # (nh*bb, N, N) f32
        s = s - jnp.max(s, axis=-1, keepdims=True)
        p = jnp.exp(s)
        p = p * pl.reciprocal(jnp.sum(p, axis=-1, keepdims=True), approx=True)
        o = bmm("bqk,bkd->bqd", p.astype(matmul_dtype), vh)  # (nh*bb, N, d) f32

        # Re-assemble heads on lanes -> (R, H); single output projection.
        o_all = jnp.concatenate(
            [o[hh * bb:(hh + 1) * bb].reshape(R, d) for hh in range(nh)],
            axis=-1)
        x = x + mm(o_all, proj_w_ref[l]) + proj_b_ref[l:l + 1, :]

        # ------------------------------- MLP --------------------------------
        h2 = _layer_norm(x, ln2_g_ref[l:l + 1, :], ln2_b_ref[l:l + 1, :])
        m = mm(h2, fc1_w_ref[l]) + fc1_b_ref[l:l + 1, :]
        # TODO(synk): PyTorch default is exact erf GELU; the tanh form (EUP
        # slot) is used by default for speed.  Pass gelu_approximate=False for
        # closer numerical parity with the reference.
        m = jax.nn.gelu(m, approximate=gelu_approximate)
        m = mm(m, fc2_w_ref[l]) + fc2_b_ref[l:l + 1, :]
        x = x + m

    # -------------------- final LayerNorm + fine_pred -----------------------
    x = _layer_norm(x, nf_g_ref[...], nf_b_ref[...])
    y = mm(x, fine_w_ref[...]) + fine_b_ref[...]
    # TODO(synk): output lane width is 3 (masked vst); emit a lane-dense slab
    # + wrapper reshape if B*N ever grows large enough to be write-bound.
    out_ref[...] = y.reshape(bb, N, 3).astype(out_ref.dtype)


# ------------------------------ wrapper --------------------------------------

def _choose_batch_block(batch, n_tokens, max_rows=1024, min_rows_per_split=128):
    """Pick the batch block so that (a) fused rows per grid step <= max_rows
    and (b) the grid is only split into >=2 steps (megacore) when each step
    still has >= min_rows_per_split fused rows; otherwise run a single step
    (per-step overhead ~0.35us dominates tiny matmuls)."""
    if batch <= 1:
        return 1
    divisors = [bb for bb in range(1, batch + 1)
                if batch % bb == 0 and bb * n_tokens <= max_rows]
    if not divisors:
        return 1
    split = [bb for bb in divisors
             if bb < batch and bb * n_tokens >= min_rows_per_split]
    if split:
        return max(split)
    return max(divisors)


def _default_matmul_dtype(rows_per_step):
    # bf16 operands only pay off once the fused row count fills a packed bf16
    # sublane group (>= 16 rows); above that bf16 wins on v5e/v6e/v7x alike.
    return jnp.bfloat16 if rows_per_step >= 16 else jnp.float32


def poi_transformer_forward(coarse_preds, poi_indices, vertebra, poi_features,
                            params, *, n_landmarks, num_layers, num_heads,
                            batch_block=None, matmul_dtype=None,
                            gelu_approximate=True):
    """Mirrors PoiTransformer.forward (dropout_rate=0 -> identity)."""
    B = coarse_preds.shape[0]
    N = n_landmarks
    if batch_block is None:
        batch_block = _choose_batch_block(B, N)
    assert B % batch_block == 0, (B, batch_block)
    if matmul_dtype is None:
        matmul_dtype = _default_matmul_dtype(batch_block * N)

    # ------- embedding / concat glue (data-dependent gathers; plain JAX) ------
    coords_embedded = coarse_preds.astype(jnp.float32) @ params["coord_w"]       # (B, N, C)
    pois_embedded = jnp.take(params["poi_emb"], poi_indices, axis=0)             # (B, N, P)
    vert_embedded = jnp.take(params["vert_emb"], vertebra[:, 0], axis=0)         # (B, V)
    vert_embedded = jnp.broadcast_to(vert_embedded[:, None, :],
                                     (B, N, vert_embedded.shape[-1]))            # (B, N, V)
    x = jnp.concatenate(
        [poi_features.astype(jnp.float32), coords_embedded, pois_embedded, vert_embedded],
        axis=-1,
    )                                                                            # (B, N, H)
    H = x.shape[-1]
    assert H % num_heads == 0, (H, num_heads)
    scale = 1.0 / ((H // num_heads) ** 0.5)

    # Fused qkv weight with the attention scale folded into the q slice; all
    # matmul weights are pre-cast to matmul_dtype here (halves weight DMA
    # bytes and removes in-kernel per-grid-step casts).  LN params and biases
    # stay f32.
    wqkv = jnp.concatenate(
        [params["wq_w"] * scale, params["wk_w"], params["wv_w"]],
        axis=-1).astype(matmul_dtype)                                            # (L, H, 3H)
    proj_w = params["proj_w"].astype(matmul_dtype)
    fc1_w = params["fc1_w"].astype(matmul_dtype)
    fc2_w = params["fc2_w"].astype(matmul_dtype)
    fine_w = params["fine_w"].astype(matmul_dtype)

    weight_args = (
        params["ln1_g"], params["ln1_b"],
        wqkv, proj_w, params["proj_b"],
        params["ln2_g"], params["ln2_b"],
        fc1_w, params["fc1_b"],
        fc2_w, params["fc2_b"],
        params["nf_g"], params["nf_b"],
        fine_w, params["fine_b"],
    )

    def full_spec(a):
        nd = a.ndim
        return pl.BlockSpec(a.shape, lambda b, _nd=nd: (0,) * _nd)

    kernel = functools.partial(
        poi_transformer_kernel, num_layers=num_layers, num_heads=num_heads,
        matmul_dtype=matmul_dtype, gelu_approximate=gelu_approximate)

    out = pl.pallas_call(
        kernel,
        out_shape=jax.ShapeDtypeStruct((B, N, 3), jnp.float32),
        grid_spec=pltpu.PrefetchScalarGridSpec(
            num_scalar_prefetch=0,
            grid=(B // batch_block,),
            in_specs=[pl.BlockSpec((batch_block, N, H), lambda b: (b, 0, 0))]
                     + [full_spec(w) for w in weight_args],
            out_specs=pl.BlockSpec((batch_block, N, 3), lambda b: (b, 0, 0)),
        ),
        compiler_params=pltpu.CompilerParams(
            dimension_semantics=("parallel",)),
    )(x, *weight_args)
    return out


# --------------------------- parameter init ----------------------------------

def init_params(key, *, poi_feature_l, coord_embedding_l, poi_embedding_l,
                vert_embedding_l, mlp_dim, num_layers, n_landmarks, n_verts):
    H = poi_feature_l + coord_embedding_l + poi_embedding_l + vert_embedding_l
    M = mlp_dim
    L = num_layers
    ks = jax.random.split(key, 12)
    s = 0.02
    params = {
        "coord_w": s * jax.random.normal(ks[0], (3, coord_embedding_l), jnp.float32),
        "poi_emb": s * jax.random.normal(ks[1], (n_landmarks, poi_embedding_l), jnp.float32),
        "vert_emb": s * jax.random.normal(ks[2], (n_verts, vert_embedding_l), jnp.float32),
        "ln1_g": jnp.ones((L, H), jnp.float32),
        "ln1_b": jnp.zeros((L, H), jnp.float32),
        "wq_w": s * jax.random.normal(ks[3], (L, H, H), jnp.float32),
        "wk_w": s * jax.random.normal(ks[4], (L, H, H), jnp.float32),
        "wv_w": s * jax.random.normal(ks[5], (L, H, H), jnp.float32),
        "proj_w": s * jax.random.normal(ks[6], (L, H, H), jnp.float32),
        "proj_b": jnp.zeros((L, H), jnp.float32),
        "ln2_g": jnp.ones((L, H), jnp.float32),
        "ln2_b": jnp.zeros((L, H), jnp.float32),
        "fc1_w": s * jax.random.normal(ks[7], (L, H, M), jnp.float32),
        "fc1_b": jnp.zeros((L, M), jnp.float32),
        "fc2_w": s * jax.random.normal(ks[8], (L, M, H), jnp.float32),
        "fc2_b": jnp.zeros((L, H), jnp.float32),
        "nf_g": jnp.ones((1, H), jnp.float32),
        "nf_b": jnp.zeros((1, H), jnp.float32),
        "fine_w": s * jax.random.normal(ks[9], (H, 3), jnp.float32),
        "fine_b": jnp.zeros((1, 3), jnp.float32),
    }
    return params, H


# --------------------------------- main ---------------------------------------

if __name__ == "__main__":
    # Small, forward-consistent shapes.
    B = 2
    n_landmarks = 8          # sequence length N
    poi_feature_l = 8
    coord_embedding_l = 8
    poi_embedding_l = 8
    vert_embedding_l = 8     # hidden = 32
    mlp_dim = 64
    num_layers = 2
    num_heads = 4
    n_verts = 22

    key = jax.random.PRNGKey(0)
    k_in, k_par = jax.random.split(key)
    k1, k2, k3, k4 = jax.random.split(k_in, 4)

    coarse_preds = jax.random.normal(k1, (B, n_landmarks, 3), jnp.float32)
    poi_indices = jax.random.randint(k2, (B, n_landmarks), 0, n_landmarks, jnp.int32)
    vertebra = jax.random.randint(k3, (B, 1), 0, n_verts, jnp.int32)
    poi_features = jax.random.normal(k4, (B, n_landmarks, poi_feature_l), jnp.float32)

    params, hidden = init_params(
        k_par,
        poi_feature_l=poi_feature_l,
        coord_embedding_l=coord_embedding_l,
        poi_embedding_l=poi_embedding_l,
        vert_embedding_l=vert_embedding_l,
        mlp_dim=mlp_dim,
        num_layers=num_layers,
        n_landmarks=n_landmarks,
        n_verts=n_verts,
    )

    # jit the whole forward so the embedding/concat glue fuses around the kernel.
    fwd = jax.jit(functools.partial(
        poi_transformer_forward,
        n_landmarks=n_landmarks, num_layers=num_layers, num_heads=num_heads))

    out = fwd(coarse_preds, poi_indices, vertebra, poi_features, params)
    out = jax.block_until_ready(out)
    assert out.shape == (B, n_landmarks, 3), out.shape
    print("KERNEL_OK")
</pallas_src>

<mosaic_0001>
module attributes {stable_mosaic.version = 11 : i64} {
  func.func @poi_transformer_kernel(%arg0: i32, %arg1: memref<2x8x32xf32, #tpu.memory_space<vmem>>, %arg2: memref<2x32xf32, #tpu.memory_space<vmem>>, %arg3: memref<2x32xf32, #tpu.memory_space<vmem>>, %arg4: memref<2x32x96xbf16, #tpu.memory_space<vmem>>, %arg5: memref<2x32x32xbf16, #tpu.memory_space<vmem>>, %arg6: memref<2x32xf32, #tpu.memory_space<vmem>>, %arg7: memref<2x32xf32, #tpu.memory_space<vmem>>, %arg8: memref<2x32xf32, #tpu.memory_space<vmem>>, %arg9: memref<2x32x64xbf16, #tpu.memory_space<vmem>>, %arg10: memref<2x64xf32, #tpu.memory_space<vmem>>, %arg11: memref<2x64x32xbf16, #tpu.memory_space<vmem>>, %arg12: memref<2x32xf32, #tpu.memory_space<vmem>>, %arg13: memref<1x32xf32, #tpu.memory_space<vmem>>, %arg14: memref<1x32xf32, #tpu.memory_space<vmem>>, %arg15: memref<32x3xbf16, #tpu.memory_space<vmem>>, %arg16: memref<1x3xf32, #tpu.memory_space<vmem>>, %arg17: memref<2x8x3xf32, #tpu.memory_space<vmem>>) attributes {dimension_semantics = [#tpu.dimension_semantics<parallel>], iteration_bounds = array<i64: 1>, scalar_prefetch = 0 : i64, scratch_operands = 0 : i64, tpu.core_type = #tpu.core_type<tc>, window_params = [{transform_indices = @transform_0, window_bounds = array<i64: 2, 8, 32>}, {pipeline_mode = #tpu.pipeline_mode<synchronous>, transform_indices = @transform_1, window_bounds = array<i64: 2, 32>}, {pipeline_mode = #tpu.pipeline_mode<synchronous>, transform_indices = @transform_2, window_bounds = array<i64: 2, 32>}, {pipeline_mode = #tpu.pipeline_mode<synchronous>, transform_indices = @transform_3, window_bounds = array<i64: 2, 32, 96>}, {pipeline_mode = #tpu.pipeline_mode<synchronous>, transform_indices = @transform_4, window_bounds = array<i64: 2, 32, 32>}, {pipeline_mode = #tpu.pipeline_mode<synchronous>, transform_indices = @transform_5, window_bounds = array<i64: 2, 32>}, {pipeline_mode = #tpu.pipeline_mode<synchronous>, transform_indices = @transform_6, window_bounds = array<i64: 2, 32>}, {pipeline_mode = #tpu.pipeline_mode<synchronous>, transform_indices = @transform_7, window_bounds = array<i64: 2, 32>}, {pipeline_mode = #tpu.pipeline_mode<synchronous>, transform_indices = @transform_8, window_bounds = array<i64: 2, 32, 64>}, {pipeline_mode = #tpu.pipeline_mode<synchronous>, transform_indices = @transform_9, window_bounds = array<i64: 2, 64>}, {pipeline_mode = #tpu.pipeline_mode<synchronous>, transform_indices = @transform_10, window_bounds = array<i64: 2, 64, 32>}, {pipeline_mode = #tpu.pipeline_mode<synchronous>, transform_indices = @transform_11, window_bounds = array<i64: 2, 32>}, {pipeline_mode = #tpu.pipeline_mode<synchronous>, transform_indices = @transform_12, window_bounds = array<i64: 1, 32>}, {pipeline_mode = #tpu.pipeline_mode<synchronous>, transform_indices = @transform_13, window_bounds = array<i64: 1, 32>}, {pipeline_mode = #tpu.pipeline_mode<synchronous>, transform_indices = @transform_14, window_bounds = array<i64: 32, 3>}, {pipeline_mode = #tpu.pipeline_mode<synchronous>, transform_indices = @transform_15, window_bounds = array<i64: 1, 3>}, {transform_indices = @transform_16, window_bounds = array<i64: 2, 8, 3>}]} {
    %c0 = arith.constant 0 : index
    %c0_0 = arith.constant 0 : index
    %c0_1 = arith.constant 0 : index
    %0 = vector.load %arg1[%c0, %c0_0, %c0_1] : memref<2x8x32xf32, #tpu.memory_space<vmem>>, vector<2x8x32xf32>
    %1 = vector.shape_cast %0 : vector<2x8x32xf32> to vector<16x32xf32>
    %c0_2 = arith.constant 0 : index
    %c0_3 = arith.constant 0 : index
    %2 = vector.load %arg2[%c0_2, %c0_3] : memref<2x32xf32, #tpu.memory_space<vmem>>, vector<1x32xf32>
    %c0_4 = arith.constant 0 : index
    %c0_5 = arith.constant 0 : index
    %3 = vector.load %arg3[%c0_4, %c0_5] : memref<2x32xf32, #tpu.memory_space<vmem>>, vector<1x32xf32>
    %cst = arith.constant dense<0.000000e+00> : vector<16xf32>
    %4 = vector.multi_reduction <add>, %1, %cst [1] : vector<16x32xf32> to vector<16xf32>
    %5 = vector.shape_cast %4 : vector<16xf32> to vector<16x1xf32>
    %cst_6 = arith.constant 3.200000e+01 : f32
    %6 = vector.broadcast %cst_6 : f32 to vector<16x1xf32>
    %7 = arith.divf %5, %6 : vector<16x1xf32>
    %8 = vector.broadcast %7 : vector<16x1xf32> to vector<16x32xf32>
    %9 = arith.subf %1, %8 : vector<16x32xf32>
    %10 = arith.mulf %9, %9 : vector<16x32xf32>
    %cst_7 = arith.constant dense<0.000000e+00> : vector<16xf32>
    %11 = vector.multi_reduction <add>, %10, %cst_7 [1] : vector<16x32xf32> to vector<16xf32>
    %12 = vector.shape_cast %11 : vector<16xf32> to vector<16x1xf32>
    %cst_8 = arith.constant 3.200000e+01 : f32
    %13 = vector.broadcast %cst_8 : f32 to vector<16x1xf32>
    %14 = arith.divf %12, %13 : vector<16x1xf32>
    %15 = vector.broadcast %7 : vector<16x1xf32> to vector<16x32xf32>
    %16 = arith.subf %1, %15 : vector<16x32xf32>
    %cst_9 = arith.constant 9.99999974E-6 : f32
    %17 = vector.broadcast %cst_9 : f32 to vector<16x1xf32>
    %18 = arith.addf %14, %17 : vector<16x1xf32>
    %19 = math.rsqrt %18 : vector<16x1xf32>
    %20 = vector.broadcast %19 : vector<16x1xf32> to vector<16x32xf32>
    %21 = arith.mulf %16, %20 : vector<16x32xf32>
    %22 = vector.broadcast %2 : vector<1x32xf32> to vector<16x32xf32>
    %23 = arith.mulf %21, %22 : vector<16x32xf32>
    %24 = vector.broadcast %3 : vector<1x32xf32> to vector<16x32xf32>
    %25 = arith.addf %23, %24 : vector<16x32xf32>
    %c0_10 = arith.constant 0 : index
    %c0_11 = arith.constant 0 : index
    %c0_12 = arith.constant 0 : index
    %26 = vector.load %arg4[%c0_10, %c0_11, %c0_12] : memref<2x32x96xbf16, #tpu.memory_space<vmem>>, vector<1x32x96xbf16>
    %27 = vector.shape_cast %26 : vector<1x32x96xbf16> to vector<32x96xbf16>
    %28 = arith.truncf %25 : vector<16x32xf32> to vector<16x32xbf16>
    %cst_13 = arith.constant dense<0.000000e+00> : vector<16x96xf32>
    %29 = tpu.matmul %28, %27, %cst_13 {dimension_numbers = #tpu.dot_dimension_numbers<[1], [0], [0], [1], [0, 0, 1, 1], [], []>} : vector<16x32xbf16>, vector<32x96xbf16>, vector<16x96xf32> -> vector<16x96xf32>
    %30 = vector.shape_cast %29 : vector<16x96xf32> to vector<2x8x96xf32>
    %31 = vector.extract_strided_slice %30 {offsets = [0, 0, 0], sizes = [2, 8, 8], strides = [1, 1, 1]} : vector<2x8x96xf32> to vector<2x8x8xf32>
    %32 = vector.extract_strided_slice %30 {offsets = [0, 0, 8], sizes = [2, 8, 8], strides = [1, 1, 1]} : vector<2x8x96xf32> to vector<2x8x8xf32>
    %33 = vector.extract_strided_slice %30 {offsets = [0, 0, 16], sizes = [2, 8, 8], strides = [1, 1, 1]} : vector<2x8x96xf32> to vector<2x8x8xf32>
    %34 = vector.extract_strided_slice %30 {offsets = [0, 0, 24], sizes = [2, 8, 8], strides = [1, 1, 1]} : vector<2x8x96xf32> to vector<2x8x8xf32>
    %35 = tpu.concatenate %31, %32, %33, %34 in 0 : vector<2x8x8xf32>, vector<2x8x8xf32>, vector<2x8x8xf32>, vector<2x8x8xf32> -> vector<8x8x8xf32>
    %36 = arith.truncf %35 : vector<8x8x8xf32> to vector<8x8x8xbf16>
    %37 = vector.extract_strided_slice %30 {offsets = [0, 0, 32], sizes = [2, 8, 8], strides = [1, 1, 1]} : vector<2x8x96xf32> to vector<2x8x8xf32>
    %38 = vector.extract_strided_slice %30 {offsets = [0, 0, 40], sizes = [2, 8, 8], strides = [1, 1, 1]} : vector<2x8x96xf32> to vector<2x8x8xf32>
    %39 = vector.extract_strided_slice %30 {offsets = [0, 0, 48], sizes = [2, 8, 8], strides = [1, 1, 1]} : vector<2x8x96xf32> to vector<2x8x8xf32>
    %40 = vector.extract_strided_slice %30 {offsets = [0, 0, 56], sizes = [2, 8, 8], strides = [1, 1, 1]} : vector<2x8x96xf32> to vector<2x8x8xf32>
    %41 = tpu.concatenate %37, %38, %39, %40 in 0 : vector<2x8x8xf32>, vector<2x8x8xf32>, vector<2x8x8xf32>, vector<2x8x8xf32> -> vector<8x8x8xf32>
    %42 = arith.truncf %41 : vector<8x8x8xf32> to vector<8x8x8xbf16>
    %43 = vector.extract_strided_slice %30 {offsets = [0, 0, 64], sizes = [2, 8, 8], strides = [1, 1, 1]} : vector<2x8x96xf32> to vector<2x8x8xf32>
    %44 = vector.extract_strided_slice %30 {offsets = [0, 0, 72], sizes = [2, 8, 8], strides = [1, 1, 1]} : vector<2x8x96xf32> to vector<2x8x8xf32>
    %45 = vector.extract_strided_slice %30 {offsets = [0, 0, 80], sizes = [2, 8, 8], strides = [1, 1, 1]} : vector<2x8x96xf32> to vector<2x8x8xf32>
    %46 = vector.extract_strided_slice %30 {offsets = [0, 0, 88], sizes = [2, 8, 8], strides = [1, 1, 1]} : vector<2x8x96xf32> to vector<2x8x8xf32>
    %47 = tpu.concatenate %43, %44, %45, %46 in 0 : vector<2x8x8xf32>, vector<2x8x8xf32>, vector<2x8x8xf32>, vector<2x8x8xf32> -> vector<8x8x8xf32>
    %48 = arith.truncf %47 : vector<8x8x8xf32> to vector<8x8x8xbf16>
    "tpu.trace_start"() <{level = 10 : i32, message = "bqd,bkd->bqk"}> : () -> ()
    %cst_14 = arith.constant dense<0.000000e+00> : vector<8x8x8xf32>
    %49 = tpu.matmul %36, %42, %cst_14 {dimension_numbers = #tpu.dot_dimension_numbers<[2], [2], [1], [1], [0, 0, 0, 1, 1, 1], [0], [0]>} : vector<8x8x8xbf16>, vector<8x8x8xbf16>, vector<8x8x8xf32> -> vector<8x8x8xf32>
    "tpu.trace_stop"() : () -> ()
    %cst_15 = arith.constant dense<0xFF800000> : vector<8x8xf32>
    %50 = vector.multi_reduction <maximumf>, %49, %cst_15 [2] : vector<8x8x8xf32> to vector<8x8xf32>
    %51 = vector.shape_cast %50 : vector<8x8xf32> to vector<8x8x1xf32>
    %52 = vector.broadcast %51 : vector<8x8x1xf32> to vector<8x8x8xf32>
    %53 = arith.subf %49, %52 : vector<8x8x8xf32>
    %54 = math.exp %53 : vector<8x8x8xf32>
    %cst_16 = arith.constant dense<0.000000e+00> : vector<8x8xf32>
    %55 = vector.multi_reduction <add>, %54, %cst_16 [2] : vector<8x8x8xf32> to vector<8x8xf32>
    %56 = vector.shape_cast %55 : vector<8x8xf32> to vector<8x8x1xf32>
    %57 = tpu.reciprocal %56 {approx = true} : vector<8x8x1xf32> -> vector<8x8x1xf32>
    %58 = vector.broadcast %57 : vector<8x8x1xf32> to vector<8x8x8xf32>
    %59 = arith.mulf %54, %58 : vector<8x8x8xf32>
    %60 = arith.truncf %59 : vector<8x8x8xf32> to vector<8x8x8xbf16>
    "tpu.trace_start"() <{level = 10 : i32, message = "bqk,bkd->bqd"}> : () -> ()
    %cst_17 = arith.constant dense<0.000000e+00> : vector<8x8x8xf32>
    %61 = tpu.matmul %60, %48, %cst_17 {dimension_numbers = #tpu.dot_dimension_numbers<[2], [1], [1], [2], [0, 0, 0, 1, 1, 2], [0], [0]>} : vector<8x8x8xbf16>, vector<8x8x8xbf16>, vector<8x8x8xf32> -> vector<8x8x8xf32>
    "tpu.trace_stop"() : () -> ()
    %62 = vector.extract_strided_slice %61 {offsets = [0, 0, 0], sizes = [2, 8, 8], strides = [1, 1, 1]} : vector<8x8x8xf32> to vector<2x8x8xf32>
    %63 = vector.shape_cast %62 : vector<2x8x8xf32> to vector<16x8xf32>
    %64 = vector.extract_strided_slice %61 {offsets = [2, 0, 0], sizes = [2, 8, 8], strides = [1, 1, 1]} : vector<8x8x8xf32> to vector<2x8x8xf32>
    %65 = vector.shape_cast %64 : vector<2x8x8xf32> to vector<16x8xf32>
    %66 = vector.extract_strided_slice %61 {offsets = [4, 0, 0], sizes = [2, 8, 8], strides = [1, 1, 1]} : vector<8x8x8xf32> to vector<2x8x8xf32>
    %67 = vector.shape_cast %66 : vector<2x8x8xf32> to vector<16x8xf32>
    %68 = vector.extract_strided_slice %61 {offsets = [6, 0, 0], sizes = [2, 8, 8], strides = [1, 1, 1]} : vector<8x8x8xf32> to vector<2x8x8xf32>
    %69 = vector.shape_cast %68 : vector<2x8x8xf32> to vector<16x8xf32>
    %70 = tpu.concatenate %63, %65, %67, %69 in 1 : vector<16x8xf32>, vector<16x8xf32>, vector<16x8xf32>, vector<16x8xf32> -> vector<16x32xf32>
    %c0_18 = arith.constant 0 : index
    %c0_19 = arith.constant 0 : index
    %c0_20 = arith.constant 0 : index
    %71 = vector.load %arg5[%c0_18, %c0_19, %c0_20] : memref<2x32x32xbf16, #tpu.memory_space<vmem>>, vector<1x32x32xbf16>
    %72 = vector.shape_cast %71 : vector<1x32x32xbf16> to vector<32x32xbf16>
    %73 = arith.truncf %70 : vector<16x32xf32> to vector<16x32xbf16>
    %cst_21 = arith.constant dense<0.000000e+00> : vector<16x32xf32>
    %74 = tpu.matmul %73, %72, %cst_21 {dimension_numbers = #tpu.dot_dimension_numbers<[1], [0], [0], [1], [0, 0, 1, 1], [], []>} : vector<16x32xbf16>, vector<32x32xbf16>, vector<16x32xf32> -> vector<16x32xf32>
    %75 = arith.addf %1, %74 : vector<16x32xf32>
    %c0_22 = arith.constant 0 : index
    %c0_23 = arith.constant 0 : index
    %76 = vector.load %arg6[%c0_22, %c0_23] : memref<2x32xf32, #tpu.memory_space<vmem>>, vector<1x32xf32>
    %77 = vector.broadcast %76 : vector<1x32xf32> to vector<16x32xf32>
    %78 = arith.addf %75, %77 : vector<16x32xf32>
    %c0_24 = arith.constant 0 : index
    %c0_25 = arith.constant 0 : index
    %79 = vector.load %arg7[%c0_24, %c0_25] : memref<2x32xf32, #tpu.memory_space<vmem>>, vector<1x32xf32>
    %c0_26 = arith.constant 0 : index
    %c0_27 = arith.constant 0 : index
    %80 = vector.load %arg8[%c0_26, %c0_27] : memref<2x32xf32, #tpu.memory_space<vmem>>, vector<1x32xf32>
    %cst_28 = arith.constant dense<0.000000e+00> : vector<16xf32>
    %81 = vector.multi_reduction <add>, %78, %cst_28 [1] : vector<16x32xf32> to vector<16xf32>
    %82 = vector.shape_cast %81 : vector<16xf32> to vector<16x1xf32>
    %cst_29 = arith.constant 3.200000e+01 : f32
    %83 = vector.broadcast %cst_29 : f32 to vector<16x1xf32>
    %84 = arith.divf %82, %83 : vector<16x1xf32>
    %85 = vector.broadcast %84 : vector<16x1xf32> to vector<16x32xf32>
    %86 = arith.subf %78, %85 : vector<16x32xf32>
    %87 = arith.mulf %86, %86 : vector<16x32xf32>
    %cst_30 = arith.constant dense<0.000000e+00> : vector<16xf32>
    %88 = vector.multi_reduction <add>, %87, %cst_30 [1] : vector<16x32xf32> to vector<16xf32>
    %89 = vector.shape_cast %88 : vector<16xf32> to vector<16x1xf32>
    %cst_31 = arith.constant 3.200000e+01 : f32
    %90 = vector.broadcast %cst_31 : f32 to vector<16x1xf32>
    %91 = arith.divf %89, %90 : vector<16x1xf32>
    %92 = vector.broadcast %84 : vector<16x1xf32> to vector<16x32xf32>
    %93 = arith.subf %78, %92 : vector<16x32xf32>
    %cst_32 = arith.constant 9.99999974E-6 : f32
    %94 = vector.broadcast %cst_32 : f32 to vector<16x1xf32>
    %95 = arith.addf %91, %94 : vector<16x1xf32>
    %96 = math.rsqrt %95 : vector<16x1xf32>
    %97 = vector.broadcast %96 : vector<16x1xf32> to vector<16x32xf32>
    %98 = arith.mulf %93, %97 : vector<16x32xf32>
    %99 = vector.broadcast %79 : vector<1x32xf32> to vector<16x32xf32>
    %100 = arith.mulf %98, %99 : vector<16x32xf32>
    %101 = vector.broadcast %80 : vector<1x32xf32> to vector<16x32xf32>
    %102 = arith.addf %100, %101 : vector<16x32xf32>
    %c0_33 = arith.constant 0 : index
    %c0_34 = arith.constant 0 : index
    %c0_35 = arith.constant 0 : index
    %103 = vector.load %arg9[%c0_33, %c0_34, %c0_35] : memref<2x32x64xbf16, #tpu.memory_space<vmem>>, vector<1x32x64xbf16>
    %104 = vector.shape_cast %103 : vector<1x32x64xbf16> to vector<32x64xbf16>
    %105 = arith.truncf %102 : vector<16x32xf32> to vector<16x32xbf16>
    %cst_36 = arith.constant dense<0.000000e+00> : vector<16x64xf32>
    %106 = tpu.matmul %105, %104, %cst_36 {dimension_numbers = #tpu.dot_dimension_numbers<[1], [0], [0], [1], [0, 0, 1, 1], [], []>} : vector<16x32xbf16>, vector<32x64xbf16>, vector<16x64xf32> -> vector<16x64xf32>
    %c0_37 = arith.constant 0 : index
    %c0_38 = arith.constant 0 : index
    %107 = vector.load %arg10[%c0_37, %c0_38] : memref<2x64xf32, #tpu.memory_space<vmem>>, vector<1x64xf32>
    %108 = vector.broadcast %107 : vector<1x64xf32> to vector<16x64xf32>
    %109 = arith.addf %106, %108 : vector<16x64xf32>
    %110 = arith.mulf %109, %109 : vector<16x64xf32>
    %111 = arith.mulf %109, %110 : vector<16x64xf32>
    %cst_39 = arith.constant 4.471500e-02 : f32
    %112 = vector.broadcast %cst_39 : f32 to vector<16x64xf32>
    %113 = arith.mulf %112, %111 : vector<16x64xf32>
    %114 = arith.addf %109, %113 : vector<16x64xf32>
    %cst_40 = arith.constant 0.797884583 : f32
    %115 = vector.broadcast %cst_40 : f32 to vector<16x64xf32>
    %116 = arith.mulf %115, %114 : vector<16x64xf32>
    %117 = math.tanh %116 : vector<16x64xf32>
    %cst_41 = arith.constant 1.000000e+00 : f32
    %118 = vector.broadcast %cst_41 : f32 to vector<16x64xf32>
    %119 = arith.addf %118, %117 : vector<16x64xf32>
    %cst_42 = arith.constant 5.000000e-01 : f32
    %120 = vector.broadcast %cst_42 : f32 to vector<16x64xf32>
    %121 = arith.mulf %120, %119 : vector<16x64xf32>
    %122 = arith.mulf %109, %121 : vector<16x64xf32>
    %c0_43 = arith.constant 0 : index
    %c0_44 = arith.constant 0 : index
    %c0_45 = arith.constant 0 : index
    %123 = vector.load %arg11[%c0_43, %c0_44, %c0_45] : memref<2x64x32xbf16, #tpu.memory_space<vmem>>, vector<1x64x32xbf16>
    %124 = vector.shape_cast %123 : vector<1x64x32xbf16> to vector<64x32xbf16>
    %125 = arith.truncf %122 : vector<16x64xf32> to vector<16x64xbf16>
    %cst_46 = arith.constant dense<0.000000e+00> : vector<16x32xf32>
    %126 = tpu.matmul %125, %124, %cst_46 {dimension_numbers = #tpu.dot_dimension_numbers<[1], [0], [0], [1], [0, 0, 1, 1], [], []>} : vector<16x64xbf16>, vector<64x32xbf16>, vector<16x32xf32> -> vector<16x32xf32>
    %c0_47 = arith.constant 0 : index
    %c0_48 = arith.constant 0 : index
    %127 = vector.load %arg12[%c0_47, %c0_48] : memref<2x32xf32, #tpu.memory_space<vmem>>, vector<1x32xf32>
    %128 = vector.broadcast %127 : vector<1x32xf32> to vector<16x32xf32>
    %129 = arith.addf %126, %128 : vector<16x32xf32>
    %130 = arith.addf %78, %129 : vector<16x32xf32>
    %c1 = arith.constant 1 : index
    %c0_49 = arith.constant 0 : index
    %131 = vector.load %arg2[%c1, %c0_49] : memref<2x32xf32, #tpu.memory_space<vmem>>, vector<1x32xf32>
    %c1_50 = arith.constant 1 : index
    %c0_51 = arith.constant 0 : index
    %132 = vector.load %arg3[%c1_50, %c0_51] : memref<2x32xf32, #tpu.memory_space<vmem>>, vector<1x32xf32>
    %cst_52 = arith.constant dense<0.000000e+00> : vector<16xf32>
    %133 = vector.multi_reduction <add>, %130, %cst_52 [1] : vector<16x32xf32> to vector<16xf32>
    %134 = vector.shape_cast %133 : vector<16xf32> to vector<16x1xf32>
    %cst_53 = arith.constant 3.200000e+01 : f32
    %135 = vector.broadcast %cst_53 : f32 to vector<16x1xf32>
    %136 = arith.divf %134, %135 : vector<16x1xf32>
    %137 = vector.broadcast %136 : vector<16x1xf32> to vector<16x32xf32>
    %138 = arith.subf %130, %137 : vector<16x32xf32>
    %139 = arith.mulf %138, %138 : vector<16x32xf32>
    %cst_54 = arith.constant dense<0.000000e+00> : vector<16xf32>
    %140 = vector.multi_reduction <add>, %139, %cst_54 [1] : vector<16x32xf32> to vector<16xf32>
    %141 = vector.shape_cast %140 : vector<16xf32> to vector<16x1xf32>
    %cst_55 = arith.constant 3.200000e+01 : f32
    %142 = vector.broadcast %cst_55 : f32 to vector<16x1xf32>
    %143 = arith.divf %141, %142 : vector<16x1xf32>
    %144 = vector.broadcast %136 : vector<16x1xf32> to vector<16x32xf32>
    %145 = arith.subf %130, %144 : vector<16x32xf32>
    %cst_56 = arith.constant 9.99999974E-6 : f32
    %146 = vector.broadcast %cst_56 : f32 to vector<16x1xf32>
    %147 = arith.addf %143, %146 : vector<16x1xf32>
    %148 = math.rsqrt %147 : vector<16x1xf32>
    %149 = vector.broadcast %148 : vector<16x1xf32> to vector<16x32xf32>
    %150 = arith.mulf %145, %149 : vector<16x32xf32>
    %151 = vector.broadcast %131 : vector<1x32xf32> to vector<16x32xf32>
    %152 = arith.mulf %150, %151 : vector<16x32xf32>
    %153 = vector.broadcast %132 : vector<1x32xf32> to vector<16x32xf32>
    %154 = arith.addf %152, %153 : vector<16x32xf32>
    %c1_57 = arith.constant 1 : index
    %c0_58 = arith.constant 0 : index
    %c0_59 = arith.constant 0 : index
    %155 = vector.load %arg4[%c1_57, %c0_58, %c0_59] : memref<2x32x96xbf16, #tpu.memory_space<vmem>>, vector<1x32x96xbf16>
    %156 = vector.shape_cast %155 : vector<1x32x96xbf16> to vector<32x96xbf16>
    %157 = arith.truncf %154 : vector<16x32xf32> to vector<16x32xbf16>
    %cst_60 = arith.constant dense<0.000000e+00> : vector<16x96xf32>
    %158 = tpu.matmul %157, %156, %cst_60 {dimension_numbers = #tpu.dot_dimension_numbers<[1], [0], [0], [1], [0, 0, 1, 1], [], []>} : vector<16x32xbf16>, vector<32x96xbf16>, vector<16x96xf32> -> vector<16x96xf32>
    %159 = vector.shape_cast %158 : vector<16x96xf32> to vector<2x8x96xf32>
    %160 = vector.extract_strided_slice %159 {offsets = [0, 0, 0], sizes = [2, 8, 8], strides = [1, 1, 1]} : vector<2x8x96xf32> to vector<2x8x8xf32>
    %161 = vector.extract_strided_slice %159 {offsets = [0, 0, 8], sizes = [2, 8, 8], strides = [1, 1, 1]} : vector<2x8x96xf32> to vector<2x8x8xf32>
    %162 = vector.extract_strided_slice %159 {offsets = [0, 0, 16], sizes = [2, 8, 8], strides = [1, 1, 1]} : vector<2x8x96xf32> to vector<2x8x8xf32>
    %163 = vector.extract_strided_slice %159 {offsets = [0, 0, 24], sizes = [2, 8, 8], strides = [1, 1, 1]} : vector<2x8x96xf32> to vector<2x8x8xf32>
    %164 = tpu.concatenate %160, %161, %162, %163 in 0 : vector<2x8x8xf32>, vector<2x8x8xf32>, vector<2x8x8xf32>, vector<2x8x8xf32> -> vector<8x8x8xf32>
    %165 = arith.truncf %164 : vector<8x8x8xf32> to vector<8x8x8xbf16>
    %166 = vector.extract_strided_slice %159 {offsets = [0, 0, 32], sizes = [2, 8, 8], strides = [1, 1, 1]} : vector<2x8x96xf32> to vector<2x8x8xf32>
    %167 = vector.extract_strided_slice %159 {offsets = [0, 0, 40], sizes = [2, 8, 8], strides = [1, 1, 1]} : vector<2x8x96xf32> to vector<2x8x8xf32>
    %168 = vector.extract_strided_slice %159 {offsets = [0, 0, 48], sizes = [2, 8, 8], strides = [1, 1, 1]} : vector<2x8x96xf32> to vector<2x8x8xf32>
    %169 = vector.extract_strided_slice %159 {offsets = [0, 0, 56], sizes = [2, 8, 8], strides = [1, 1, 1]} : vector<2x8x96xf32> to vector<2x8x8xf32>
    %170 = tpu.concatenate %166, %167, %168, %169 in 0 : vector<2x8x8xf32>, vector<2x8x8xf32>, vector<2x8x8xf32>, vector<2x8x8xf32> -> vector<8x8x8xf32>
    %171 = arith.truncf %170 : vector<8x8x8xf32> to vector<8x8x8xbf16>
    %172 = vector.extract_strided_slice %159 {offsets = [0, 0, 64], sizes = [2, 8, 8], strides = [1, 1, 1]} : vector<2x8x96xf32> to vector<2x8x8xf32>
    %173 = vector.extract_strided_slice %159 {offsets = [0, 0, 72], sizes = [2, 8, 8], strides = [1, 1, 1]} : vector<2x8x96xf32> to vector<2x8x8xf32>
    %174 = vector.extract_strided_slice %159 {offsets = [0, 0, 80], sizes = [2, 8, 8], strides = [1, 1, 1]} : vector<2x8x96xf32> to vector<2x8x8xf32>
    %175 = vector.extract_strided_slice %159 {offsets = [0, 0, 88], sizes = [2, 8, 8], strides = [1, 1, 1]} : vector<2x8x96xf32> to vector<2x8x8xf32>
    %176 = tpu.concatenate %172, %173, %174, %175 in 0 : vector<2x8x8xf32>, vector<2x8x8xf32>, vector<2x8x8xf32>, vector<2x8x8xf32> -> vector<8x8x8xf32>
    %177 = arith.truncf %176 : vector<8x8x8xf32> to vector<8x8x8xbf16>
    "tpu.trace_start"() <{level = 10 : i32, message = "bqd,bkd->bqk"}> : () -> ()
    %cst_61 = arith.constant dense<0.000000e+00> : vector<8x8x8xf32>
    %178 = tpu.matmul %165, %171, %cst_61 {dimension_numbers = #tpu.dot_dimension_numbers<[2], [2], [1], [1], [0, 0, 0, 1, 1, 1], [0], [0]>} : vector<8x8x8xbf16>, vector<8x8x8xbf16>, vector<8x8x8xf32> -> vector<8x8x8xf32>
    "tpu.trace_stop"() : () -> ()
    %cst_62 = arith.constant dense<0xFF800000> : vector<8x8xf32>
    %179 = vector.multi_reduction <maximumf>, %178, %cst_62 [2] : vector<8x8x8xf32> to vector<8x8xf32>
    %180 = vector.shape_cast %179 : vector<8x8xf32> to vector<8x8x1xf32>
    %181 = vector.broadcast %180 : vector<8x8x1xf32> to vector<8x8x8xf32>
    %182 = arith.subf %178, %181 : vector<8x8x8xf32>
    %183 = math.exp %182 : vector<8x8x8xf32>
    %cst_63 = arith.constant dense<0.000000e+00> : vector<8x8xf32>
    %184 = vector.multi_reduction <add>, %183, %cst_63 [2] : vector<8x8x8xf32> to vector<8x8xf32>
    %185 = vector.shape_cast %184 : vector<8x8xf32> to vector<8x8x1xf32>
    %186 = tpu.reciprocal %185 {approx = true} : vector<8x8x1xf32> -> vector<8x8x1xf32>
    %187 = vector.broadcast %186 : vector<8x8x1xf32> to vector<8x8x8xf32>
    %188 = arith.mulf %183, %187 : vector<8x8x8xf32>
    %189 = arith.truncf %188 : vector<8x8x8xf32> to vector<8x8x8xbf16>
    "tpu.trace_start"() <{level = 10 : i32, message = "bqk,bkd->bqd"}> : () -> ()
    %cst_64 = arith.constant dense<0.000000e+00> : vector<8x8x8xf32>
    %190 = tpu.matmul %189, %177, %cst_64 {dimension_numbers = #tpu.dot_dimension_numbers<[2], [1], [1], [2], [0, 0, 0, 1, 1, 2], [0], [0]>} : vector<8x8x8xbf16>, vector<8x8x8xbf16>, vector<8x8x8xf32> -> vector<8x8x8xf32>
    "tpu.trace_stop"() : () -> ()
    %191 = vector.extract_strided_slice %190 {offsets = [0, 0, 0], sizes = [2, 8, 8], strides = [1, 1, 1]} : vector<8x8x8xf32> to vector<2x8x8xf32>
    %192 = vector.shape_cast %191 : vector<2x8x8xf32> to vector<16x8xf32>
    %193 = vector.extract_strided_slice %190 {offsets = [2, 0, 0], sizes = [2, 8, 8], strides = [1, 1, 1]} : vector<8x8x8xf32> to vector<2x8x8xf32>
    %194 = vector.shape_cast %193 : vector<2x8x8xf32> to vector<16x8xf32>
    %195 = vector.extract_strided_slice %190 {offsets = [4, 0, 0], sizes = [2, 8, 8], strides = [1, 1, 1]} : vector<8x8x8xf32> to vector<2x8x8xf32>
    %196 = vector.shape_cast %195 : vector<2x8x8xf32> to vector<16x8xf32>
    %197 = vector.extract_strided_slice %190 {offsets = [6, 0, 0], sizes = [2, 8, 8], strides = [1, 1, 1]} : vector<8x8x8xf32> to vector<2x8x8xf32>
    %198 = vector.shape_cast %197 : vector<2x8x8xf32> to vector<16x8xf32>
    %199 = tpu.concatenate %192, %194, %196, %198 in 1 : vector<16x8xf32>, vector<16x8xf32>, vector<16x8xf32>, vector<16x8xf32> -> vector<16x32xf32>
    %c1_65 = arith.constant 1 : index
    %c0_66 = arith.constant 0 : index
    %c0_67 = arith.constant 0 : index
    %200 = vector.load %arg5[%c1_65, %c0_66, %c0_67] : memref<2x32x32xbf16, #tpu.memory_space<vmem>>, vector<1x32x32xbf16>
    %201 = vector.shape_cast %200 : vector<1x32x32xbf16> to vector<32x32xbf16>
    %202 = arith.truncf %199 : vector<16x32xf32> to vector<16x32xbf16>
    %cst_68 = arith.constant dense<0.000000e+00> : vector<16x32xf32>
    %203 = tpu.matmul %202, %201, %cst_68 {dimension_numbers = #tpu.dot_dimension_numbers<[1], [0], [0], [1], [0, 0, 1, 1], [], []>} : vector<16x32xbf16>, vector<32x32xbf16>, vector<16x32xf32> -> vector<16x32xf32>
    %204 = arith.addf %130, %203 : vector<16x32xf32>
    %c1_69 = arith.constant 1 : index
    %c0_70 = arith.constant 0 : index
    %205 = vector.load %arg6[%c1_69, %c0_70] : memref<2x32xf32, #tpu.memory_space<vmem>>, vector<1x32xf32>
    %206 = vector.broadcast %205 : vector<1x32xf32> to vector<16x32xf32>
    %207 = arith.addf %204, %206 : vector<16x32xf32>
    %c1_71 = arith.constant 1 : index
    %c0_72 = arith.constant 0 : index
    %208 = vector.load %arg7[%c1_71, %c0_72] : memref<2x32xf32, #tpu.memory_space<vmem>>, vector<1x32xf32>
    %c1_73 = arith.constant 1 : index
    %c0_74 = arith.constant 0 : index
    %209 = vector.load %arg8[%c1_73, %c0_74] : memref<2x32xf32, #tpu.memory_space<vmem>>, vector<1x32xf32>
    %cst_75 = arith.constant dense<0.000000e+00> : vector<16xf32>
    %210 = vector.multi_reduction <add>, %207, %cst_75 [1] : vector<16x32xf32> to vector<16xf32>
    %211 = vector.shape_cast %210 : vector<16xf32> to vector<16x1xf32>
    %cst_76 = arith.constant 3.200000e+01 : f32
    %212 = vector.broadcast %cst_76 : f32 to vector<16x1xf32>
    %213 = arith.divf %211, %212 : vector<16x1xf32>
    %214 = vector.broadcast %213 : vector<16x1xf32> to vector<16x32xf32>
    %215 = arith.subf %207, %214 : vector<16x32xf32>
    %216 = arith.mulf %215, %215 : vector<16x32xf32>
    %cst_77 = arith.constant dense<0.000000e+00> : vector<16xf32>
    %217 = vector.multi_reduction <add>, %216, %cst_77 [1] : vector<16x32xf32> to vector<16xf32>
    %218 = vector.shape_cast %217 : vector<16xf32> to vector<16x1xf32>
    %cst_78 = arith.constant 3.200000e+01 : f32
    %219 = vector.broadcast %cst_78 : f32 to vector<16x1xf32>
    %220 = arith.divf %218, %219 : vector<16x1xf32>
    %221 = vector.broadcast %213 : vector<16x1xf32> to vector<16x32xf32>
    %222 = arith.subf %207, %221 : vector<16x32xf32>
    %cst_79 = arith.constant 9.99999974E-6 : f32
    %223 = vector.broadcast %cst_79 : f32 to vector<16x1xf32>
    %224 = arith.addf %220, %223 : vector<16x1xf32>
    %225 = math.rsqrt %224 : vector<16x1xf32>
    %226 = vector.broadcast %225 : vector<16x1xf32> to vector<16x32xf32>
    %227 = arith.mulf %222, %226 : vector<16x32xf32>
    %228 = vector.broadcast %208 : vector<1x32xf32> to vector<16x32xf32>
    %229 = arith.mulf %227, %228 : vector<16x32xf32>
    %230 = vector.broadcast %209 : vector<1x32xf32> to vector<16x32xf32>
    %231 = arith.addf %229, %230 : vector<16x32xf32>
    %c1_80 = arith.constant 1 : index
    %c0_81 = arith.constant 0 : index
    %c0_82 = arith.constant 0 : index
    %232 = vector.load %arg9[%c1_80, %c0_81, %c0_82] : memref<2x32x64xbf16, #tpu.memory_space<vmem>>, vector<1x32x64xbf16>
    %233 = vector.shape_cast %232 : vector<1x32x64xbf16> to vector<32x64xbf16>
    %234 = arith.truncf %231 : vector<16x32xf32> to vector<16x32xbf16>
    %cst_83 = arith.constant dense<0.000000e+00> : vector<16x64xf32>
    %235 = tpu.matmul %234, %233, %cst_83 {dimension_numbers = #tpu.dot_dimension_numbers<[1], [0], [0], [1], [0, 0, 1, 1], [], []>} : vector<16x32xbf16>, vector<32x64xbf16>, vector<16x64xf32> -> vector<16x64xf32>
    %c1_84 = arith.constant 1 : index
    %c0_85 = arith.constant 0 : index
    %236 = vector.load %arg10[%c1_84, %c0_85] : memref<2x64xf32, #tpu.memory_space<vmem>>, vector<1x64xf32>
    %237 = vector.broadcast %236 : vector<1x64xf32> to vector<16x64xf32>
    %238 = arith.addf %235, %237 : vector<16x64xf32>
    %239 = arith.mulf %238, %238 : vector<16x64xf32>
    %240 = arith.mulf %238, %239 : vector<16x64xf32>
    %cst_86 = arith.constant 4.471500e-02 : f32
    %241 = vector.broadcast %cst_86 : f32 to vector<16x64xf32>
    %242 = arith.mulf %241, %240 : vector<16x64xf32>
    %243 = arith.addf %238, %242 : vector<16x64xf32>
    %cst_87 = arith.constant 0.797884583 : f32
    %244 = vector.broadcast %cst_87 : f32 to vector<16x64xf32>
    %245 = arith.mulf %244, %243 : vector<16x64xf32>
    %246 = math.tanh %245 : vector<16x64xf32>
    %cst_88 = arith.constant 1.000000e+00 : f32
    %247 = vector.broadcast %cst_88 : f32 to vector<16x64xf32>
    %248 = arith.addf %247, %246 : vector<16x64xf32>
    %cst_89 = arith.constant 5.000000e-01 : f32
    %249 = vector.broadcast %cst_89 : f32 to vector<16x64xf32>
    %250 = arith.mulf %249, %248 : vector<16x64xf32>
    %251 = arith.mulf %238, %250 : vector<16x64xf32>
    %c1_90 = arith.constant 1 : index
    %c0_91 = arith.constant 0 : index
    %c0_92 = arith.constant 0 : index
    %252 = vector.load %arg11[%c1_90, %c0_91, %c0_92] : memref<2x64x32xbf16, #tpu.memory_space<vmem>>, vector<1x64x32xbf16>
    %253 = vector.shape_cast %252 : vector<1x64x32xbf16> to vector<64x32xbf16>
    %254 = arith.truncf %251 : vector<16x64xf32> to vector<16x64xbf16>
    %cst_93 = arith.constant dense<0.000000e+00> : vector<16x32xf32>
    %255 = tpu.matmul %254, %253, %cst_93 {dimension_numbers = #tpu.dot_dimension_numbers<[1], [0], [0], [1], [0, 0, 1, 1], [], []>} : vector<16x64xbf16>, vector<64x32xbf16>, vector<16x32xf32> -> vector<16x32xf32>
    %c1_94 = arith.constant 1 : index
    %c0_95 = arith.constant 0 : index
    %256 = vector.load %arg12[%c1_94, %c0_95] : memref<2x32xf32, #tpu.memory_space<vmem>>, vector<1x32xf32>
    %257 = vector.broadcast %256 : vector<1x32xf32> to vector<16x32xf32>
    %258 = arith.addf %255, %257 : vector<16x32xf32>
    %259 = arith.addf %207, %258 : vector<16x32xf32>
    %c0_96 = arith.constant 0 : index
    %c0_97 = arith.constant 0 : index
    %260 = vector.load %arg13[%c0_96, %c0_97] : memref<1x32xf32, #tpu.memory_space<vmem>>, vector<1x32xf32>
    %c0_98 = arith.constant 0 : index
    %c0_99 = arith.constant 0 : index
    %261 = vector.load %arg14[%c0_98, %c0_99] : memref<1x32xf32, #tpu.memory_space<vmem>>, vector<1x32xf32>
    %cst_100 = arith.constant dense<0.000000e+00> : vector<16xf32>
    %262 = vector.multi_reduction <add>, %259, %cst_100 [1] : vector<16x32xf32> to vector<16xf32>
    %263 = vector.shape_cast %262 : vector<16xf32> to vector<16x1xf32>
    %cst_101 = arith.constant 3.200000e+01 : f32
    %264 = vector.broadcast %cst_101 : f32 to vector<16x1xf32>
    %265 = arith.divf %263, %264 : vector<16x1xf32>
    %266 = vector.broadcast %265 : vector<16x1xf32> to vector<16x32xf32>
    %267 = arith.subf %259, %266 : vector<16x32xf32>
    %268 = arith.mulf %267, %267 : vector<16x32xf32>
    %cst_102 = arith.constant dense<0.000000e+00> : vector<16xf32>
    %269 = vector.multi_reduction <add>, %268, %cst_102 [1] : vector<16x32xf32> to vector<16xf32>
    %270 = vector.shape_cast %269 : vector<16xf32> to vector<16x1xf32>
    %cst_103 = arith.constant 3.200000e+01 : f32
    %271 = vector.broadcast %cst_103 : f32 to vector<16x1xf32>
    %272 = arith.divf %270, %271 : vector<16x1xf32>
    %273 = vector.broadcast %265 : vector<16x1xf32> to vector<16x32xf32>
    %274 = arith.subf %259, %273 : vector<16x32xf32>
    %cst_104 = arith.constant 9.99999974E-6 : f32
    %275 = vector.broadcast %cst_104 : f32 to vector<16x1xf32>
    %276 = arith.addf %272, %275 : vector<16x1xf32>
    %277 = math.rsqrt %276 : vector<16x1xf32>
    %278 = vector.broadcast %277 : vector<16x1xf32> to vector<16x32xf32>
    %279 = arith.mulf %274, %278 : vector<16x32xf32>
    %280 = vector.broadcast %260 : vector<1x32xf32> to vector<16x32xf32>
    %281 = arith.mulf %279, %280 : vector<16x32xf32>
    %282 = vector.broadcast %261 : vector<1x32xf32> to vector<16x32xf32>
    %283 = arith.addf %281, %282 : vector<16x32xf32>
    %c0_105 = arith.constant 0 : index
    %c0_106 = arith.constant 0 : index
    %284 = vector.load %arg15[%c0_105, %c0_106] : memref<32x3xbf16, #tpu.memory_space<vmem>>, vector<32x3xbf16>
    %285 = arith.truncf %283 : vector<16x32xf32> to vector<16x32xbf16>
    %cst_107 = arith.constant dense<0.000000e+00> : vector<16x3xf32>
    %286 = tpu.matmul %285, %284, %cst_107 {dimension_numbers = #tpu.dot_dimension_numbers<[1], [0], [0], [1], [0, 0, 1, 1], [], []>} : vector<16x32xbf16>, vector<32x3xbf16>, vector<16x3xf32> -> vector<16x3xf32>
    %c0_108 = arith.constant 0 : index
    %c0_109 = arith.constant 0 : index
    %287 = vector.load %arg16[%c0_108, %c0_109] : memref<1x3xf32, #tpu.memory_space<vmem>>, vector<1x3xf32>
    %288 = vector.broadcast %287 : vector<1x3xf32> to vector<16x3xf32>
    %289 = arith.addf %286, %288 : vector<16x3xf32>
    %290 = vector.shape_cast %289 : vector<16x3xf32> to vector<2x8x3xf32>
    %c0_110 = arith.constant 0 : index
    %c0_111 = arith.constant 0 : index
    %c0_112 = arith.constant 0 : index
    %291 = vector.load %arg17[%c0_110, %c0_111, %c0_112] : memref<2x8x3xf32, #tpu.memory_space<vmem>>, vector<2x8x3xf32>
    tpu.vector_store %arg17[%c0_110, %c0_111, %c0_112], %290 {strides = array<i32>} : memref<2x8x3xf32, #tpu.memory_space<vmem>>, vector<2x8x3xf32>,
    return
  }
  func.func @transform_0(%arg0: i32) -> (i32, i32, i32) {
    %c0_i32 = arith.constant 0 : i32
    %c0_i32_0 = arith.constant 0 : i32
    %c0_i32_1 = arith.constant 0 : i32
    return %arg0, %c0_i32, %c0_i32_0 : i32, i32, i32
  }
  func.func @transform_1(%arg0: i32) -> (i32, i32) {
    %c0_i32 = arith.constant 0 : i32
    %c0_i32_0 = arith.constant 0 : i32
    %c0_i32_1 = arith.constant 0 : i32
    return %c0_i32, %c0_i32_0 : i32, i32
  }
  func.func @transform_2(%arg0: i32) -> (i32, i32) {
    %c0_i32 = arith.constant 0 : i32
    %c0_i32_0 = arith.constant 0 : i32
    %c0_i32_1 = arith.constant 0 : i32
    return %c0_i32, %c0_i32_0 : i32, i32
  }
  func.func @transform_3(%arg0: i32) -> (i32, i32, i32) {
    %c0_i32 = arith.constant 0 : i32
    %c0_i32_0 = arith.constant 0 : i32
    %c0_i32_1 = arith.constant 0 : i32
    %c0_i32_2 = arith.constant 0 : i32
    return %c0_i32, %c0_i32_0, %c0_i32_1 : i32, i32, i32
  }
  func.func @transform_4(%arg0: i32) -> (i32, i32, i32) {
    %c0_i32 = arith.constant 0 : i32
    %c0_i32_0 = arith.constant 0 : i32
    %c0_i32_1 = arith.constant 0 : i32
    %c0_i32_2 = arith.constant 0 : i32
    return %c0_i32, %c0_i32_0, %c0_i32_1 : i32, i32, i32
  }
  func.func @transform_5(%arg0: i32) -> (i32, i32) {
    %c0_i32 = arith.constant 0 : i32
    %c0_i32_0 = arith.constant 0 : i32
    %c0_i32_1 = arith.constant 0 : i32
    return %c0_i32, %c0_i32_0 : i32, i32
  }
  func.func @transform_6(%arg0: i32) -> (i32, i32) {
    %c0_i32 = arith.constant 0 : i32
    %c0_i32_0 = arith.constant 0 : i32
    %c0_i32_1 = arith.constant 0 : i32
    return %c0_i32, %c0_i32_0 : i32, i32
  }
  func.func @transform_7(%arg0: i32) -> (i32, i32) {
    %c0_i32 = arith.constant 0 : i32
    %c0_i32_0 = arith.constant 0 : i32
    %c0_i32_1 = arith.constant 0 : i32
    return %c0_i32, %c0_i32_0 : i32, i32
  }
  func.func @transform_8(%arg0: i32) -> (i32, i32, i32) {
    %c0_i32 = arith.constant 0 : i32
    %c0_i32_0 = arith.constant 0 : i32
    %c0_i32_1 = arith.constant 0 : i32
    %c0_i32_2 = arith.constant 0 : i32
    return %c0_i32, %c0_i32_0, %c0_i32_1 : i32, i32, i32
  }
  func.func @transform_9(%arg0: i32) -> (i32, i32) {
    %c0_i32 = arith.constant 0 : i32
    %c0_i32_0 = arith.constant 0 : i32
    %c0_i32_1 = arith.constant 0 : i32
    return %c0_i32, %c0_i32_0 : i32, i32
  }
  func.func @transform_10(%arg0: i32) -> (i32, i32, i32) {
    %c0_i32 = arith.constant 0 : i32
    %c0_i32_0 = arith.constant 0 : i32
    %c0_i32_1 = arith.constant 0 : i32
    %c0_i32_2 = arith.constant 0 : i32
    return %c0_i32, %c0_i32_0, %c0_i32_1 : i32, i32, i32
  }
  func.func @transform_11(%arg0: i32) -> (i32, i32) {
    %c0_i32 = arith.constant 0 : i32
    %c0_i32_0 = arith.constant 0 : i32
    %c0_i32_1 = arith.constant 0 : i32
    return %c0_i32, %c0_i32_0 : i32, i32
  }
  func.func @transform_12(%arg0: i32) -> (i32, i32) {
    %c0_i32 = arith.constant 0 : i32
    %c0_i32_0 = arith.constant 0 : i32
    %c0_i32_1 = arith.constant 0 : i32
    return %c0_i32, %c0_i32_0 : i32, i32
  }
  func.func @transform_13(%arg0: i32) -> (i32, i32) {
    %c0_i32 = arith.constant 0 : i32
    %c0_i32_0 = arith.constant 0 : i32
    %c0_i32_1 = arith.constant 0 : i32
    return %c0_i32, %c0_i32_0 : i32, i32
  }
  func.func @transform_14(%arg0: i32) -> (i32, i32) {
    %c0_i32 = arith.constant 0 : i32
    %c0_i32_0 = arith.constant 0 : i32
    %c0_i32_1 = arith.constant 0 : i32
    return %c0_i32, %c0_i32_0 : i32, i32
  }
  func.func @transform_15(%arg0: i32) -> (i32, i32) {
    %c0_i32 = arith.constant 0 : i32
    %c0_i32_0 = arith.constant 0 : i32
    %c0_i32_1 = arith.constant 0 : i32
    return %c0_i32, %c0_i32_0 : i32, i32
  }
  func.func @transform_16(%arg0: i32) -> (i32, i32, i32) {
    %c0_i32 = arith.constant 0 : i32
    %c0_i32_0 = arith.constant 0 : i32
    %c0_i32_1 = arith.constant 0 : i32
    return %arg0, %c0_i32, %c0_i32_0 : i32, i32, i32
  }
}

</mosaic_0001>

<llo_original>
// kernel: poi_transformer_forward.1
$region0: #{poi_transformer_forward.1}
  #allocation0 [shape = 'u32[]', space=smem, size = 0x4, offset = 0x4, fixed_abs, tag = 'smem constant byte address 0x4 - core index']
  #allocation1 [shape = 'u32[72,128]{1,0:T(1,128)}', space=vmem, size = 0x9000, scoped, tag = 'internal scratch']
  %s0 = inlined_call_operand.vmem [shape: f32[2,8,32], index: 0, kind: input, shape index: {}]
  %s1 = inlined_call_operand.vmem [shape: f32[2,32], index: 1, kind: input, shape index: {}]
  %s2 = inlined_call_operand.vmem [shape: f32[2,32], index: 2, kind: input, shape index: {}]
  %s3 = inlined_call_operand.vmem [shape: bf16[2,32,96], index: 3, kind: input, shape index: {}]
  %s4 = inlined_call_operand.vmem [shape: bf16[2,32,32], index: 4, kind: input, shape index: {}]
  %s5 = inlined_call_operand.vmem [shape: f32[2,32], index: 5, kind: input, shape index: {}]
  %s6 = inlined_call_operand.vmem [shape: f32[2,32], index: 6, kind: input, shape index: {}]
  %s7 = inlined_call_operand.vmem [shape: f32[2,32], index: 7, kind: input, shape index: {}]
  %s8 = inlined_call_operand.vmem [shape: bf16[2,32,64], index: 8, kind: input, shape index: {}]
  %s9 = inlined_call_operand.vmem [shape: f32[2,64], index: 9, kind: input, shape index: {}]
  %s10 = inlined_call_operand.vmem [shape: bf16[2,64,32], index: 10, kind: input, shape index: {}]
  %s11 = inlined_call_operand.vmem [shape: f32[2,32], index: 11, kind: input, shape index: {}]
  %s12 = inlined_call_operand.vmem [shape: f32[1,32], index: 12, kind: input, shape index: {}]
  %s13 = inlined_call_operand.vmem [shape: f32[1,32], index: 13, kind: input, shape index: {}]
  %s14 = inlined_call_operand.vmem [shape: bf16[32,3], index: 14, kind: input, shape index: {}]
  %s15 = inlined_call_operand.vmem [shape: f32[1,3], index: 15, kind: input, shape index: {}]
  %s16 = inlined_call_operand.vmem [shape: f32[2,8,3], index: 16, kind: output, shape index: {}]
  %s17 = sld [smem:[#allocation0]]
  $region74: #{poi_transformer_forward.1} parent=0
    _
  %s19 = ssub.s32 1, %s17
  %s20 = scalar_select 0, %s19, %s17
  // Predicated region
  $region2: #{poi_transformer_forward.1} parent=0 // pred_check
    _
  $region3: #{poi_transformer_forward.1} parent=0 // pred_check_branch
    %22 = sbr.rel (0) target = $region5
  $region4: #{poi_transformer_forward.1} parent=0 // pred_region
    _
  $region5: #{poi_transformer_forward.1} parent=0 // pred_fallthru
    _
  // Predicated region
  $region6: #{poi_transformer_forward.1} parent=0 // pred_check
    _
  $region7: #{poi_transformer_forward.1} parent=0 // pred_check_branch
    %24 = sbr.rel (0) target = $region9
  $region8: #{poi_transformer_forward.1} parent=0 // pred_region
    _
  $region9: #{poi_transformer_forward.1} parent=0 // pred_fallthru
    _
  // Predicated region
  $region10: #{poi_transformer_forward.1} parent=0 // pred_check
    _
  $region11: #{poi_transformer_forward.1} parent=0 // pred_check_branch
    %26 = sbr.rel (0) target = $region13
  $region12: #{poi_transformer_forward.1} parent=0 // pred_region
    _
  $region13: #{poi_transformer_forward.1} parent=0 // pred_fallthru
    _
  // Predicated region
  $region14: #{poi_transformer_forward.1} parent=0 // pred_check
    _
  $region15: #{poi_transformer_forward.1} parent=0 // pred_check_branch
    %28 = sbr.rel (0) target = $region17
  $region16: #{poi_transformer_forward.1} parent=0 // pred_region
    _
  $region17: #{poi_transformer_forward.1} parent=0 // pred_fallthru
    _
  // Predicated region
  $region18: #{poi_transformer_forward.1} parent=0 // pred_check
    _
  $region19: #{poi_transformer_forward.1} parent=0 // pred_check_branch
    %30 = sbr.rel (0) target = $region21
  $region20: #{poi_transformer_forward.1} parent=0 // pred_region
    _
  $region21: #{poi_transformer_forward.1} parent=0 // pred_fallthru
    _
  // Predicated region
  $region22: #{poi_transformer_forward.1} parent=0 // pred_check
    _
  $region23: #{poi_transformer_forward.1} parent=0 // pred_check_branch
    %32 = sbr.rel (0) target = $region25
  $region24: #{poi_transformer_forward.1} parent=0 // pred_region
    _
  $region25: #{poi_transformer_forward.1} parent=0 // pred_fallthru
    _
  // Predicated region
  $region26: #{poi_transformer_forward.1} parent=0 // pred_check
    _
  $region27: #{poi_transformer_forward.1} parent=0 // pred_check_branch
    %34 = sbr.rel (0) target = $region29
  $region28: #{poi_transformer_forward.1} parent=0 // pred_region
    _
  $region29: #{poi_transformer_forward.1} parent=0 // pred_fallthru
    _
  // Predicated region
  $region30: #{poi_transformer_forward.1} parent=0 // pred_check
    _
  $region31: #{poi_transformer_forward.1} parent=0 // pred_check_branch
    %36 = sbr.rel (0) target = $region33
  $region32: #{poi_transformer_forward.1} parent=0 // pred_region
    _
  $region33: #{poi_transformer_forward.1} parent=0 // pred_fallthru
    _
  // Predicated region
  $region34: #{poi_transformer_forward.1} parent=0 // pred_check
    _
  $region35: #{poi_transformer_forward.1} parent=0 // pred_check_branch
    %38 = sbr.rel (0) target = $region37
  $region36: #{poi_transformer_forward.1} parent=0 // pred_region
    _
  $region37: #{poi_transformer_forward.1} parent=0 // pred_fallthru
    _
  // Predicated region
  $region38: #{poi_transformer_forward.1} parent=0 // pred_check
    _
  $region39: #{poi_transformer_forward.1} parent=0 // pred_check_branch
    %40 = sbr.rel (0) target = $region41
  $region40: #{poi_transformer_forward.1} parent=0 // pred_region
    _
  $region41: #{poi_transformer_forward.1} parent=0 // pred_fallthru
    _
  // Predicated region
  $region42: #{poi_transformer_forward.1} parent=0 // pred_check
    _
  $region43: #{poi_transformer_forward.1} parent=0 // pred_check_branch
    %42 = sbr.rel (0) target = $region45
  $region44: #{poi_transformer_forward.1} parent=0 // pred_region
    _
  $region45: #{poi_transformer_forward.1} parent=0 // pred_fallthru
    _
  // Predicated region
  $region46: #{poi_transformer_forward.1} parent=0 // pred_check
    _
  $region47: #{poi_transformer_forward.1} parent=0 // pred_check_branch
    %44 = sbr.rel (0) target = $region49
  $region48: #{poi_transformer_forward.1} parent=0 // pred_region
    _
  $region49: #{poi_transformer_forward.1} parent=0 // pred_fallthru
    _
  // Predicated region
  $region50: #{poi_transformer_forward.1} parent=0 // pred_check
    _
  $region51: #{poi_transformer_forward.1} parent=0 // pred_check_branch
    %46 = sbr.rel (0) target = $region53
  $region52: #{poi_transformer_forward.1} parent=0 // pred_region
    _
  $region53: #{poi_transformer_forward.1} parent=0 // pred_fallthru
    _
  // Predicated region
  $region54: #{poi_transformer_forward.1} parent=0 // pred_check
    _
  $region55: #{poi_transformer_forward.1} parent=0 // pred_check_branch
    %48 = sbr.rel (0) target = $region57
  $region56: #{poi_transformer_forward.1} parent=0 // pred_region
    _
  $region57: #{poi_transformer_forward.1} parent=0 // pred_fallthru
    _
  // Predicated region
  $region58: #{poi_transformer_forward.1} parent=0 // pred_check
    _
  $region59: #{poi_transformer_forward.1} parent=0 // pred_check_branch
    %50 = sbr.rel (0) target = $region61
  $region60: #{poi_transformer_forward.1} parent=0 // pred_region
    _
  $region61: #{poi_transformer_forward.1} parent=0 // pred_fallthru
    _
  // Predicated region
  $region62: #{poi_transformer_forward.1} parent=0 // pred_check
    _
  $region63: #{poi_transformer_forward.1} parent=0 // pred_check_branch
    %52 = sbr.rel (0) target = $region65
  $region64: #{poi_transformer_forward.1} parent=0 // pred_region
    _
  $region65: #{poi_transformer_forward.1} parent=0 // pred_fallthru
    _
  %v54 = vld [vmem:[%s0] sm:$0xff]
  %v55 = vld [vmem:[%s0 + $0x8] sm:$0xff]
  %v56 = vld [vmem:[%s1] sm:$0x1]
  %v57 = vld [vmem:[%s2] sm:$0x1]
  %vm58 = vcmask 261120
  %v59 = vsel %vm58, %v54, 0.0
  %60 = vadd.xlane.f32.xlu0 %v59
  %v61 = vpop.xlane.xlu0 %60
  %v62 = vsel %vm58, %v55, 0.0
  %63 = vadd.xlane.f32.xlu0 %v62
  %v64 = vpop.xlane.xlu0 %63
  %v65 = vrcp.pop 32.0
  %v66 = vmul.f32 32.0, %v65
  %v67 = vsub.f32 1.0, %v66
  %v68 = vmul.f32 %v65, %v67
  %v69 = vadd.f32 %v65, %v68
  %vm70 = vweird.f32 %v65
  %v71 = vsel %vm70, %v65, %v69
  %v72 = vmul.f32 %v61, %v71
  %v73 = vmul.f32 %v64, %v71
  %v74 = vsub.f32 %v54, %v72
  %v75 = vsub.f32 %v55, %v73
  %v76 = vmul.f32 %v74, %v74
  %v77 = vmul.f32 %v75, %v75
  %v78 = vsel %vm58, %v76, 0.0
  %79 = vadd.xlane.f32.xlu0 %v78
  %v80 = vpop.xlane.xlu0 %79
  %v81 = vsel %vm58, %v77, 0.0
  %82 = vadd.xlane.f32.xlu0 %v81
  %v83 = vpop.xlane.xlu0 %82
  %v84 = vmul.f32 %v80, %v71
  %v85 = vmul.f32 %v83, %v71
  %v86 = vadd.f32 %v84, 1e-05
  %v87 = vadd.f32 %v85, 1e-05
  %v88 = vrsqrt.pop %v86
  %v89 = vmul.f32 %v88, %v86
  %v90 = vmul.f32 %v89, %v88
  %v91 = vmul.f32 0.5, %v90
  %v92 = vsub.f32 1.5, %v91
  %v93 = vmul.f32 %v88, %v92
  %vm94 = vweird.f32 %v86
  %vm95 = vweird.f32 %v88
  %vm96 = vmor %vm94, %vm95
  %v97 = vsel %vm96, %v88, %v93
  %v98 = vrsqrt.pop %v87
  %v99 = vmul.f32 %v98, %v87
  %v100 = vmul.f32 %v99, %v98
  %v101 = vmul.f32 0.5, %v100
  %v102 = vsub.f32 1.5, %v101
  %v103 = vmul.f32 %v98, %v102
  %vm104 = vweird.f32 %v87
  %vm105 = vweird.f32 %v98
  %vm106 = vmor %vm104, %vm105
  %v107 = vsel %vm106, %v98, %v103
  %v108 = vmul.f32 %v74, %v97
  %v109 = vmul.f32 %v75, %v107
  %v110 = vperm.slane %v56, 0
  %v111 = vmul.f32 %v108, %v110
  %v112 = vmul.f32 %v109, %v110
  %v113 = vperm.slane %v57, 0
  %v114 = vadd.f32 %v111, %v113
  %v115 = vadd.f32 %v112, %v113
  %v116 = vld [vmem:[%s3] sm:$0xf]
  %v117 = vld [vmem:[%s3 + $0x4] sm:$0xf]
  %v118 = vld [vmem:[%s3 + $0x8] sm:$0xf]
  %v119 = vld [vmem:[%s3 + $0xc] sm:$0xf]
  %v120 = vpack.c.bf16 %v115, %v114
  %v125 = vunpack.c.l.b16 %v116
  %v126 = vunpack.c.l.b16 %v117
  %v127 = vunpack.c.l.b16 %v118
  %v128 = vunpack.c.l.b16 %v119
  %v129 = vpack.c.b16 %v126, %v125
  %v130 = vpack.c.b16 %v128, %v127
  %v134 = vsel %vm58, %v120, 0
  %136 = vmatpush.bf16.msra.mxu0 0
  %137 = vmatpush.bf16.msra.mxu0 0
  %138 = vmatpush.bf16.msra.mxu0 0
  %139 = vmatpush.bf16.msra.mxu0 0
  %140 = vmatpush.bf16.msra.mxu0 0
  %141 = vmatpush.bf16.msra.mxu0 0
  %142 = vmatpush.bf16.msra.mxu0 %v130
  %143 = vmatpush.bf16.msra.mxu0 %v129
  %144 = vmatmul.bf16.gmra.mxu0 %v134
  %v145 = vpop.f32.mrf.mxu0
  %v146 = vadd.f32 0.0, %v145
  %v147 = vpop.f32.mrf.mxu0
  %v148 = vadd.f32 0.0, %v147
  %149 = vdwg.mxu0
  %152 = vrot.lane.b32.xlu0 %v146, 120
  %v153 = vpop.permute.xlu0 %152
  %154 = vrot.lane.b32.xlu0 %v148, 120
  %v155 = vpop.permute.xlu0 %154
  %158 = vrot.lane.b32.xlu0 %v146, 112
  %v159 = vpop.permute.xlu0 %158
  %160 = vrot.lane.b32.xlu0 %v148, 112
  %v161 = vpop.permute.xlu0 %160
  %164 = vrot.lane.b32.xlu0 %v146, 104
  %v165 = vpop.permute.xlu0 %164
  %166 = vrot.lane.b32.xlu0 %v148, 104
  %v167 = vpop.permute.xlu0 %166
  %v170 = vpack.c.bf16 %v146, %v146
  %v171 = vpack.c.bf16 %v148, %v148
  %v172 = vpack.c.bf16 %v153, %v153
  %v173 = vpack.c.bf16 %v155, %v155
  %v174 = vpack.c.bf16 %v159, %v159
  %v175 = vpack.c.bf16 %v161, %v161
  %v176 = vpack.c.bf16 %v165, %v165
  %v177 = vpack.c.bf16 %v167, %v167
  %v179 = vunpack.c.l.b16 %v170
  %v180 = vpack.c.b16 %v179, %v179
  %181 = vrot.lane.b32.xlu0 %v180, 96
  %v182 = vpop.permute.xlu0 %181
  %vm183 = vcmask 64512
  %v185 = vsel %vm183, %v170, 0
  %v188 = vsel %vm183, %v182, 0
  %190 = vmatpush.bf16.xpose.msra.mxu0 0
  %191 = vmatpush.bf16.xpose.msra.mxu0 0
  %192 = vmatpush.bf16.xpose.msra.mxu0 0
  %193 = vmatpush.bf16.xpose.msra.mxu0 0
  %194 = vmatpush.bf16.xpose.msra.mxu0 0
  %195 = vmatpush.bf16.xpose.msra.mxu0 0
  %196 = vmatpush.bf16.xpose.msra.mxu0 0
  %197 = vmatpush.bf16.xpose.msra.mxu0 %v188
  %198 = vmatmul.bf16.gmra.mxu0 %v185
  %v199 = vpop.f32.mrf.mxu0
  %v200 = vadd.f32 0.0, %v199
  %v201 = vpop.f32.mrf.mxu0
  %202 = vdwg.mxu0
  %v204 = vunpack.c.l.b16 %v171
  %v205 = vpack.c.b16 %v204, %v204
  %206 = vrot.lane.b32.xlu0 %v205, 96
  %v207 = vpop.permute.xlu0 %206
  %v209 = vsel %vm183, %v171, 0
  %v212 = vsel %vm183, %v207, 0
  %214 = vmatpush.bf16.xpose.msra.mxu0 0
  %215 = vmatpush.bf16.xpose.msra.mxu0 0
  %216 = vmatpush.bf16.xpose.msra.mxu0 0
  %217 = vmatpush.bf16.xpose.msra.mxu0 0
  %218 = vmatpush.bf16.xpose.msra.mxu0 0
  %219 = vmatpush.bf16.xpose.msra.mxu0 0
  %220 = vmatpush.bf16.xpose.msra.mxu0 0
  %221 = vmatpush.bf16.xpose.msra.mxu0 %v212
  %222 = vmatmul.bf16.gmra.mxu0 %v209
  %v223 = vpop.f32.mrf.mxu0
  %v224 = vadd.f32 0.0, %v223
  %v225 = vpop.f32.mrf.mxu0
  %226 = vdwg.mxu0
  %v228 = vunpack.c.l.b16 %v172
  %v229 = vpack.c.b16 %v228, %v228
  %230 = vrot.lane.b32.xlu0 %v229, 96
  %v231 = vpop.permute.xlu0 %230
  %v233 = vsel %vm183, %v172, 0
  %v236 = vsel %vm183, %v231, 0
  %238 = vmatpush.bf16.xpose.msra.mxu0 0
  %239 = vmatpush.bf16.xpose.msra.mxu0 0
  %240 = vmatpush.bf16.xpose.msra.mxu0 0
  %241 = vmatpush.bf16.xpose.msra.mxu0 0
  %242 = vmatpush.bf16.xpose.msra.mxu0 0
  %243 = vmatpush.bf16.xpose.msra.mxu0 0
  %244 = vmatpush.bf16.xpose.msra.mxu0 0
  %245 = vmatpush.bf16.xpose.msra.mxu0 %v236
  %246 = vmatmul.bf16.gmra.mxu0 %v233
  %v247 = vpop.f32.mrf.mxu0
  %v248 = vadd.f32 0.0, %v247
  %v249 = vpop.f32.mrf.mxu0
  %250 = vdwg.mxu0
  %v252 = vunpack.c.l.b16 %v173
  %v253 = vpack.c.b16 %v252, %v252
  %254 = vrot.lane.b32.xlu0 %v253, 96
  %v255 = vpop.permute.xlu0 %254
  %v257 = vsel %vm183, %v173, 0
  %v260 = vsel %vm183, %v255, 0
  %262 = vmatpush.bf16.xpose.msra.mxu0 0
  %263 = vmatpush.bf16.xpose.msra.mxu0 0
  %264 = vmatpush.bf16.xpose.msra.mxu0 0
  %265 = vmatpush.bf16.xpose.msra.mxu0 0
  %266 = vmatpush.bf16.xpose.msra.mxu0 0
  %267 = vmatpush.bf16.xpose.msra.mxu0 0
  %268 = vmatpush.bf16.xpose.msra.mxu0 0
  %269 = vmatpush.bf16.xpose.msra.mxu0 %v260
  %270 = vmatmul.bf16.gmra.mxu0 %v257
  %v271 = vpop.f32.mrf.mxu0
  %v272 = vadd.f32 0.0, %v271
  %v273 = vpop.f32.mrf.mxu0
  %274 = vdwg.mxu0
  %v276 = vunpack.c.l.b16 %v174
  %v277 = vpack.c.b16 %v276, %v276
  %278 = vrot.lane.b32.xlu0 %v277, 96
  %v279 = vpop.permute.xlu0 %278
  %v281 = vsel %vm183, %v174, 0
  %v284 = vsel %vm183, %v279, 0
  %286 = vmatpush.bf16.xpose.msra.mxu0 0
  %287 = vmatpush.bf16.xpose.msra.mxu0 0
  %288 = vmatpush.bf16.xpose.msra.mxu0 0
  %289 = vmatpush.bf16.xpose.msra.mxu0 0
  %290 = vmatpush.bf16.xpose.msra.mxu0 0
  %291 = vmatpush.bf16.xpose.msra.mxu0 0
  %292 = vmatpush.bf16.xpose.msra.mxu0 0
  %293 = vmatpush.bf16.xpose.msra.mxu0 %v284
  %294 = vmatmul.bf16.gmra.mxu0 %v281
  %v295 = vpop.f32.mrf.mxu0
  %v296 = vadd.f32 0.0, %v295
  %v297 = vpop.f32.mrf.mxu0
  %298 = vdwg.mxu0
  %v300 = vunpack.c.l.b16 %v175
  %v301 = vpack.c.b16 %v300, %v300
  %302 = vrot.lane.b32.xlu0 %v301, 96
  %v303 = vpop.permute.xlu0 %302
  %v305 = vsel %vm183, %v175, 0
  %v308 = vsel %vm183, %v303, 0
  %310 = vmatpush.bf16.xpose.msra.mxu0 0
  %311 = vmatpush.bf16.xpose.msra.mxu0 0
  %312 = vmatpush.bf16.xpose.msra.mxu0 0
  %313 = vmatpush.bf16.xpose.msra.mxu0 0
  %314 = vmatpush.bf16.xpose.msra.mxu0 0
  %315 = vmatpush.bf16.xpose.msra.mxu0 0
  %316 = vmatpush.bf16.xpose.msra.mxu0 0
  %317 = vmatpush.bf16.xpose.msra.mxu0 %v308
  %318 = vmatmul.bf16.gmra.mxu0 %v305
  %v319 = vpop.f32.mrf.mxu0
  %v320 = vadd.f32 0.0, %v319
  %v321 = vpop.f32.mrf.mxu0
  %322 = vdwg.mxu0
  %v324 = vunpack.c.l.b16 %v176
  %v325 = vpack.c.b16 %v324, %v324
  %326 = vrot.lane.b32.xlu0 %v325, 96
  %v327 = vpop.permute.xlu0 %326
  %v329 = vsel %vm183, %v176, 0
  %v332 = vsel %vm183, %v327, 0
  %334 = vmatpush.bf16.xpose.msra.mxu0 0
  %335 = vmatpush.bf16.xpose.msra.mxu0 0
  %336 = vmatpush.bf16.xpose.msra.mxu0 0
  %337 = vmatpush.bf16.xpose.msra.mxu0 0
  %338 = vmatpush.bf16.xpose.msra.mxu0 0
  %339 = vmatpush.bf16.xpose.msra.mxu0 0
  %340 = vmatpush.bf16.xpose.msra.mxu0 0
  %341 = vmatpush.bf16.xpose.msra.mxu0 %v332
  %342 = vmatmul.bf16.gmra.mxu0 %v329
  %v343 = vpop.f32.mrf.mxu0
  %v344 = vadd.f32 0.0, %v343
  %v345 = vpop.f32.mrf.mxu0
  %346 = vdwg.mxu0
  %v348 = vunpack.c.l.b16 %v177
  %v349 = vpack.c.b16 %v348, %v348
  %350 = vrot.lane.b32.xlu0 %v349, 96
  %v351 = vpop.permute.xlu0 %350
  %v353 = vsel %vm183, %v177, 0
  %v356 = vsel %vm183, %v351, 0
  %358 = vmatpush.bf16.xpose.msra.mxu0 0
  %359 = vmatpush.bf16.xpose.msra.mxu0 0
  %360 = vmatpush.bf16.xpose.msra.mxu0 0
  %361 = vmatpush.bf16.xpose.msra.mxu0 0
  %362 = vmatpush.bf16.xpose.msra.mxu0 0
  %363 = vmatpush.bf16.xpose.msra.mxu0 0
  %364 = vmatpush.bf16.xpose.msra.mxu0 0
  %365 = vmatpush.bf16.xpose.msra.mxu0 %v356
  %366 = vmatmul.bf16.gmra.mxu0 %v353
  %v367 = vpop.f32.mrf.mxu0
  %v368 = vadd.f32 0.0, %v367
  %v369 = vpop.f32.mrf.mxu0
  %370 = vdwg.mxu0
  %v371 = vsel %vm183, %v200, -inf
  %372 = vmax.xlane.f32.xlu0 %v371
  %v373 = vpop.xlane.xlu0 %372
  %v374 = vsel %vm183, %v224, -inf
  %375 = vmax.xlane.f32.xlu0 %v374
  %v376 = vpop.xlane.xlu0 %375
  %v377 = vsel %vm183, %v248, -inf
  %378 = vmax.xlane.f32.xlu0 %v377
  %v379 = vpop.xlane.xlu0 %378
  %v380 = vsel %vm183, %v272, -inf
  %381 = vmax.xlane.f32.xlu0 %v380
  %v382 = vpop.xlane.xlu0 %381
  %v383 = vsel %vm183, %v296, -inf
  %384 = vmax.xlane.f32.xlu0 %v383
  %v385 = vpop.xlane.xlu0 %384
  %v386 = vsel %vm183, %v320, -inf
  %387 = vmax.xlane.f32.xlu0 %v386
  %v388 = vpop.xlane.xlu0 %387
  %v389 = vsel %vm183, %v344, -inf
  %390 = vmax.xlane.f32.xlu0 %v389
  %v391 = vpop.xlane.xlu0 %390
  %v392 = vsel %vm183, %v368, -inf
  %393 = vmax.xlane.f32.xlu0 %v392
  %v394 = vpop.xlane.xlu0 %393
  %v395 = vsub.f32 %v200, %v373
  %v396 = vsub.f32 %v224, %v376
  %v397 = vsub.f32 %v248, %v379
  %v398 = vsub.f32 %v272, %v382
  %v399 = vsub.f32 %v296, %v385
  %v400 = vsub.f32 %v320, %v388
  %v401 = vsub.f32 %v344, %v391
  %v402 = vsub.f32 %v368, %v394
  %v403 = vmul.f32 %v395, 1.442695
  %v404 = vpow.pop %v403
  %v405 = vmul.f32 %v396, 1.442695
  %v406 = vpow.pop %v405
  %v407 = vmul.f32 %v397, 1.442695
  %v408 = vpow.pop %v407
  %v409 = vmul.f32 %v398, 1.442695
  %v410 = vpow.pop %v409
  %v411 = vmul.f32 %v399, 1.442695
  %v412 = vpow.pop %v411
  %v413 = vmul.f32 %v400, 1.442695
  %v414 = vpow.pop %v413
  %v415 = vmul.f32 %v401, 1.442695
  %v416 = vpow.pop %v415
  %v417 = vmul.f32 %v402, 1.442695
  %v418 = vpow.pop %v417
  %v419 = vsel %vm183, %v404, 0.0
  %420 = vadd.xlane.f32.xlu0 %v419
  %v421 = vpop.xlane.xlu0 %420
  %v422 = vsel %vm183, %v406, 0.0
  %423 = vadd.xlane.f32.xlu0 %v422
  %v424 = vpop.xlane.xlu0 %423
  %v425 = vsel %vm183, %v408, 0.0
  %426 = vadd.xlane.f32.xlu0 %v425
  %v427 = vpop.xlane.xlu0 %426
  %v428 = vsel %vm183, %v410, 0.0
  %429 = vadd.xlane.f32.xlu0 %v428
  %v430 = vpop.xlane.xlu0 %429
  %v431 = vsel %vm183, %v412, 0.0
  %432 = vadd.xlane.f32.xlu0 %v431
  %v433 = vpop.xlane.xlu0 %432
  %v434 = vsel %vm183, %v414, 0.0
  %435 = vadd.xlane.f32.xlu0 %v434
  %v436 = vpop.xlane.xlu0 %435
  %v437 = vsel %vm183, %v416, 0.0
  %438 = vadd.xlane.f32.xlu0 %v437
  %v439 = vpop.xlane.xlu0 %438
  %v440 = vsel %vm183, %v418, 0.0
  %441 = vadd.xlane.f32.xlu0 %v440
  %v442 = vpop.xlane.xlu0 %441
  %v443 = vrcp.pop %v421
  %v444 = vrcp.pop %v424
  %v445 = vrcp.pop %v427
  %v446 = vrcp.pop %v430
  %v447 = vrcp.pop %v433
  %v448 = vrcp.pop %v436
  %v449 = vrcp.pop %v439
  %v450 = vrcp.pop %v442
  %v451 = vmul.f32 %v404, %v443
  %v452 = vmul.f32 %v406, %v444
  %v453 = vmul.f32 %v408, %v445
  %v454 = vmul.f32 %v410, %v446
  %v455 = vmul.f32 %v412, %v447
  %v456 = vmul.f32 %v414, %v448
  %v457 = vmul.f32 %v416, %v449
  %v458 = vmul.f32 %v418, %v450
  %v459 = vpack.c.bf16 %v451, %v451
  %v460 = vpack.c.bf16 %v452, %v452
  %v461 = vpack.c.bf16 %v453, %v453
  %v462 = vpack.c.bf16 %v454, %v454
  %v463 = vpack.c.bf16 %v455, %v455
  %v464 = vpack.c.bf16 %v456, %v456
  %v465 = vpack.c.bf16 %v457, %v457
  %v466 = vpack.c.bf16 %v458, %v458
  %467 = vrot.lane.b32.xlu0 %v180, 64
  %v468 = vpop.permute.xlu0 %467
  %v470 = vsel %vm183, %v459, 0
  %vm472 = vcmask 1043456
  %v474 = vsel %vm472, %v468, 0
  %476 = vmatpush.bf16.msra.mxu0 0
  %477 = vmatpush.bf16.msra.mxu0 0
  %478 = vmatpush.bf16.msra.mxu0 0
  %479 = vmatpush.bf16.msra.mxu0 0
  %480 = vmatpush.bf16.msra.mxu0 0
  %481 = vmatpush.bf16.msra.mxu0 0
  %482 = vmatpush.bf16.msra.mxu0 0
  %483 = vmatpush.bf16.msra.mxu0 %v474
  %484 = vmatmul.bf16.gmra.mxu0 %v470
  %v485 = vpop.f32.mrf.mxu0
  %v486 = vadd.f32 0.0, %v485
  %v487 = vpop.f32.mrf.mxu0
  %488 = vdwg.mxu0
  %489 = vrot.lane.b32.xlu0 %v205, 64
  %v490 = vpop.permute.xlu0 %489
  %v492 = vsel %vm183, %v460, 0
  %v495 = vsel %vm472, %v490, 0
  %497 = vmatpush.bf16.msra.mxu0 0
  %498 = vmatpush.bf16.msra.mxu0 0
  %499 = vmatpush.bf16.msra.mxu0 0
  %500 = vmatpush.bf16.msra.mxu0 0
  %501 = vmatpush.bf16.msra.mxu0 0
  %502 = vmatpush.bf16.msra.mxu0 0
  %503 = vmatpush.bf16.msra.mxu0 0
  %504 = vmatpush.bf16.msra.mxu0 %v495
  %505 = vmatmul.bf16.gmra.mxu0 %v492
  %v506 = vpop.f32.mrf.mxu0
  %v507 = vadd.f32 0.0, %v506
  %v508 = vpop.f32.mrf.mxu0
  %509 = vdwg.mxu0
  %510 = vrot.lane.b32.xlu0 %v229, 64
  %v511 = vpop.permute.xlu0 %510
  %v513 = vsel %vm183, %v461, 0
  %v516 = vsel %vm472, %v511, 0
  %518 = vmatpush.bf16.msra.mxu0 0
  %519 = vmatpush.bf16.msra.mxu0 0
  %520 = vmatpush.bf16.msra.mxu0 0
  %521 = vmatpush.bf16.msra.mxu0 0
  %522 = vmatpush.bf16.msra.mxu0 0
  %523 = vmatpush.bf16.msra.mxu0 0
  %524 = vmatpush.bf16.msra.mxu0 0
  %525 = vmatpush.bf16.msra.mxu0 %v516
  %526 = vmatmul.bf16.gmra.mxu0 %v513
  %v527 = vpop.f32.mrf.mxu0
  %v528 = vadd.f32 0.0, %v527
  %v529 = vpop.f32.mrf.mxu0
  %530 = vdwg.mxu0
  %531 = vrot.lane.b32.xlu0 %v253, 64
  %v532 = vpop.permute.xlu0 %531
  %v534 = vsel %vm183, %v462, 0
  %v537 = vsel %vm472, %v532, 0
  %539 = vmatpush.bf16.msra.mxu0 0
  %540 = vmatpush.bf16.msra.mxu0 0
  %541 = vmatpush.bf16.msra.mxu0 0
  %542 = vmatpush.bf16.msra.mxu0 0
  %543 = vmatpush.bf16.msra.mxu0 0
  %544 = vmatpush.bf16.msra.mxu0 0
  %545 = vmatpush.bf16.msra.mxu0 0
  %546 = vmatpush.bf16.msra.mxu0 %v537
  %547 = vmatmul.bf16.gmra.mxu0 %v534
  %v548 = vpop.f32.mrf.mxu0
  %v549 = vadd.f32 0.0, %v548
  %v550 = vpop.f32.mrf.mxu0
  %551 = vdwg.mxu0
  %552 = vrot.lane.b32.xlu0 %v277, 64
  %v553 = vpop.permute.xlu0 %552
  %v555 = vsel %vm183, %v463, 0
  %v558 = vsel %vm472, %v553, 0
  %560 = vmatpush.bf16.msra.mxu0 0
  %561 = vmatpush.bf16.msra.mxu0 0
  %562 = vmatpush.bf16.msra.mxu0 0
  %563 = vmatpush.bf16.msra.mxu0 0
  %564 = vmatpush.bf16.msra.mxu0 0
  %565 = vmatpush.bf16.msra.mxu0 0
  %566 = vmatpush.bf16.msra.mxu0 0
  %567 = vmatpush.bf16.msra.mxu0 %v558
  %568 = vmatmul.bf16.gmra.mxu0 %v555
  %v569 = vpop.f32.mrf.mxu0
  %v570 = vadd.f32 0.0, %v569
  %v571 = vpop.f32.mrf.mxu0
  %572 = vdwg.mxu0
  %573 = vrot.lane.b32.xlu0 %v301, 64
  %v574 = vpop.permute.xlu0 %573
  %v576 = vsel %vm183, %v464, 0
  %v579 = vsel %vm472, %v574, 0
  %581 = vmatpush.bf16.msra.mxu0 0
  %582 = vmatpush.bf16.msra.mxu0 0
  %583 = vmatpush.bf16.msra.mxu0 0
  %584 = vmatpush.bf16.msra.mxu0 0
  %585 = vmatpush.bf16.msra.mxu0 0
  %586 = vmatpush.bf16.msra.mxu0 0
  %587 = vmatpush.bf16.msra.mxu0 0
  %588 = vmatpush.bf16.msra.mxu0 %v579
  %589 = vmatmul.bf16.gmra.mxu0 %v576
  %v590 = vpop.f32.mrf.mxu0
  %v591 = vadd.f32 0.0, %v590
  %v592 = vpop.f32.mrf.mxu0
  %593 = vdwg.mxu0
  %594 = vrot.lane.b32.xlu0 %v325, 64
  %v595 = vpop.permute.xlu0 %594
  %v597 = vsel %vm183, %v465, 0
  %v600 = vsel %vm472, %v595, 0
  %602 = vmatpush.bf16.msra.mxu0 0
  %603 = vmatpush.bf16.msra.mxu0 0
  %604 = vmatpush.bf16.msra.mxu0 0
  %605 = vmatpush.bf16.msra.mxu0 0
  %606 = vmatpush.bf16.msra.mxu0 0
  %607 = vmatpush.bf16.msra.mxu0 0
  %608 = vmatpush.bf16.msra.mxu0 0
  %609 = vmatpush.bf16.msra.mxu0 %v600
  %610 = vmatmul.bf16.gmra.mxu0 %v597
  %v611 = vpop.f32.mrf.mxu0
  %v612 = vadd.f32 0.0, %v611
  %v613 = vpop.f32.mrf.mxu0
  %614 = vdwg.mxu0
  %615 = vrot.lane.b32.xlu0 %v349, 64
  %v616 = vpop.permute.xlu0 %615
  %v618 = vsel %vm183, %v466, 0
  %v621 = vsel %vm472, %v616, 0
  %623 = vmatpush.bf16.msra.mxu0 0
  %624 = vmatpush.bf16.msra.mxu0 0
  %625 = vmatpush.bf16.msra.mxu0 0
  %626 = vmatpush.bf16.msra.mxu0 0
  %627 = vmatpush.bf16.msra.mxu0 0
  %628 = vmatpush.bf16.msra.mxu0 0
  %629 = vmatpush.bf16.msra.mxu0 0
  %630 = vmatpush.bf16.msra.mxu0 %v621
  %631 = vmatmul.bf16.gmra.mxu0 %v618
  %v632 = vpop.f32.mrf.mxu0
  %v633 = vadd.f32 0.0, %v632
  %v634 = vpop.f32.mrf.mxu0
  %635 = vdwg.mxu0
  %638 = vrot.lane.b32.xlu0 %v528, 8
  %v639 = vpop.permute.xlu0 %638
  %640 = vrot.lane.b32.xlu0 %v549, 8
  %v641 = vpop.permute.xlu0 %640
  %646 = vrot.lane.b32.xlu0 %v570, 16
  %v647 = vpop.permute.xlu0 %646
  %648 = vrot.lane.b32.xlu0 %v591, 16
  %v649 = vpop.permute.xlu0 %648
  %654 = vrot.lane.b32.xlu0 %v612, 24
  %v655 = vpop.permute.xlu0 %654
  %656 = vrot.lane.b32.xlu0 %v633, 24
  %v657 = vpop.permute.xlu0 %656
  %v660 = vsel %vm183, %v486, %v639
  %v661 = vsel %vm183, %v507, %v641
  %vm662 = vcmask 130048
  %v663 = vsel %vm662, %v660, %v647
  %v664 = vsel %vm662, %v661, %v649
  %vm665 = vcmask 195584
  %v666 = vsel %vm665, %v663, %v655
  %v667 = vsel %vm665, %v664, %v657
  %v668 = vld [vmem:[%s4] sm:$0xf]
  %v669 = vld [vmem:[%s4 + $0x4] sm:$0xf]
  %v670 = vld [vmem:[%s4 + $0x8] sm:$0xf]
  %v671 = vld [vmem:[%s4 + $0xc] sm:$0xf]
  %v672 = vpack.c.bf16 %v667, %v666
  %v677 = vunpack.c.l.b16 %v668
  %v678 = vunpack.c.l.b16 %v669
  %v679 = vunpack.c.l.b16 %v670
  %v680 = vunpack.c.l.b16 %v671
  %v681 = vpack.c.b16 %v678, %v677
  %v682 = vpack.c.b16 %v680, %v679
  %v686 = vsel %vm58, %v672, 0
  %688 = vmatpush.bf16.msra.mxu0 0
  %689 = vmatpush.bf16.msra.mxu0 0
  %690 = vmatpush.bf16.msra.mxu0 0
  %691 = vmatpush.bf16.msra.mxu0 0
  %692 = vmatpush.bf16.msra.mxu0 0
  %693 = vmatpush.bf16.msra.mxu0 0
  %694 = vmatpush.bf16.msra.mxu0 %v682
  %695 = vmatpush.bf16.msra.mxu0 %v681
  %696 = vmatmul.bf16.gmra.mxu0 %v686
  %v697 = vpop.f32.mrf.mxu0
  %v698 = vadd.f32 0.0, %v697
  %v699 = vpop.f32.mrf.mxu0
  %v700 = vadd.f32 0.0, %v699
  %701 = vdwg.mxu0
  %v702 = vadd.f32 %v54, %v698
  %v703 = vadd.f32 %v55, %v700
  %v704 = vld [vmem:[%s5] sm:$0x1]
  %v705 = vperm.slane %v704, 0
  %v706 = vadd.f32 %v702, %v705
  %v707 = vadd.f32 %v703, %v705
  %v708 = vld [vmem:[%s6] sm:$0x1]
  %v709 = vld [vmem:[%s7] sm:$0x1]
  %v710 = vsel %vm58, %v706, 0.0
  %711 = vadd.xlane.f32.xlu0 %v710
  %v712 = vpop.xlane.xlu0 %711
  %v713 = vsel %vm58, %v707, 0.0
  %714 = vadd.xlane.f32.xlu0 %v713
  %v715 = vpop.xlane.xlu0 %714
  %v716 = vmul.f32 %v712, %v71
  %v717 = vmul.f32 %v715, %v71
  %v718 = vsub.f32 %v706, %v716
  %v719 = vsub.f32 %v707, %v717
  %v720 = vmul.f32 %v718, %v718
  %v721 = vmul.f32 %v719, %v719
  %v722 = vsel %vm58, %v720, 0.0
  %723 = vadd.xlane.f32.xlu0 %v722
  %v724 = vpop.xlane.xlu0 %723
  %v725 = vsel %vm58, %v721, 0.0
  %726 = vadd.xlane.f32.xlu0 %v725
  %v727 = vpop.xlane.xlu0 %726
  %v728 = vmul.f32 %v724, %v71
  %v729 = vmul.f32 %v727, %v71
  %v730 = vadd.f32 %v728, 1e-05
  %v731 = vadd.f32 %v729, 1e-05
  %v732 = vrsqrt.pop %v730
  %v733 = vmul.f32 %v732, %v730
  %v734 = vmul.f32 %v733, %v732
  %v735 = vmul.f32 0.5, %v734
  %v736 = vsub.f32 1.5, %v735
  %v737 = vmul.f32 %v732, %v736
  %vm738 = vweird.f32 %v730
  %vm739 = vweird.f32 %v732
  %vm740 = vmor %vm738, %vm739
  %v741 = vsel %vm740, %v732, %v737
  %v742 = vrsqrt.pop %v731
  %v743 = vmul.f32 %v742, %v731
  %v744 = vmul.f32 %v743, %v742
  %v745 = vmul.f32 0.5, %v744
  %v746 = vsub.f32 1.5, %v745
  %v747 = vmul.f32 %v742, %v746
  %vm748 = vweird.f32 %v731
  %vm749 = vweird.f32 %v742
  %vm750 = vmor %vm748, %vm749
  %v751 = vsel %vm750, %v742, %v747
  %v752 = vmul.f32 %v718, %v741
  %v753 = vmul.f32 %v719, %v751
  %v754 = vperm.slane %v708, 0
  %v755 = vmul.f32 %v752, %v754
  %v756 = vmul.f32 %v753, %v754
  %v757 = vperm.slane %v709, 0
  %v758 = vadd.f32 %v755, %v757
  %v759 = vadd.f32 %v756, %v757
  %v760 = vld [vmem:[%s8] sm:$0xf]
  %v761 = vld [vmem:[%s8 + $0x4] sm:$0xf]
  %v762 = vld [vmem:[%s8 + $0x8] sm:$0xf]
  %v763 = vld [vmem:[%s8 + $0xc] sm:$0xf]
  %v764 = vpack.c.bf16 %v759, %v758
  %v765 = vld [vmem:[%s9] sm:$0x1]
  %v766 = vperm.slane %v765, 0
  %v771 = vunpack.c.l.b16 %v760
  %v772 = vunpack.c.l.b16 %v761
  %v773 = vunpack.c.l.b16 %v762
  %v774 = vunpack.c.l.b16 %v763
  %v775 = vpack.c.b16 %v772, %v771
  %v776 = vpack.c.b16 %v774, %v773
  %v780 = vsel %vm58, %v764, 0
  %782 = vmatpush.bf16.msra.mxu0 0
  %783 = vmatpush.bf16.msra.mxu0 0
  %784 = vmatpush.bf16.msra.mxu0 0
  %785 = vmatpush.bf16.msra.mxu0 0
  %786 = vmatpush.bf16.msra.mxu0 0
  %787 = vmatpush.bf16.msra.mxu0 0
  %788 = vmatpush.bf16.msra.mxu0 %v776
  %789 = vmatpush.bf16.msra.mxu0 %v775
  %790 = vmatmul.bf16.gmra.mxu0 %v780
  %v791 = vpop.f32.mrf.mxu0
  %v792 = vadd.f32 %v766, %v791
  %v793 = vpop.f32.mrf.mxu0
  %v794 = vadd.f32 %v766, %v793
  %795 = vdwg.mxu0
  %v796 = vmul.f32 %v792, %v792
  %v797 = vmul.f32 %v794, %v794
  %v798 = vmul.f32 %v792, %v796
  %v799 = vmul.f32 %v794, %v797
  %v800 = vmul.f32 %v798, 0.044715
  %v801 = vmul.f32 %v799, 0.044715
  %v802 = vadd.f32 %v792, %v800
  %v803 = vadd.f32 %v794, %v801
  %v804 = vmul.f32 %v802, 0.7978846
  %v805 = vmul.f32 %v803, 0.7978846
  %v806 = vtanh.pop %v804
  %v807 = vtanh.pop %v805
  %v808 = vadd.f32 %v806, 1.0
  %v809 = vadd.f32 %v807, 1.0
  %v810 = vmul.f32 %v808, 0.5
  %v811 = vmul.f32 %v809, 0.5
  %v812 = vmul.f32 %v792, %v810
  %v813 = vmul.f32 %v794, %v811
  %v814 = vld [vmem:[%s10] sm:$0xf]
  %v815 = vld [vmem:[%s10 + $0x4] sm:$0xf]
  %v816 = vld [vmem:[%s10 + $0x8] sm:$0xf]
  %v817 = vld [vmem:[%s10 + $0xc] sm:$0xf]
  %v818 = vld [vmem:[%s10 + $0x10] sm:$0xf]
  %v819 = vld [vmem:[%s10 + $0x14] sm:$0xf]
  %v820 = vld [vmem:[%s10 + $0x18] sm:$0xf]
  %v821 = vld [vmem:[%s10 + $0x1c] sm:$0xf]
  %v822 = vpack.c.bf16 %v813, %v812
  %v823 = vld [vmem:[%s11] sm:$0x1]
  %v824 = vperm.slane %v823, 0
  %v833 = vunpack.c.l.b16 %v814
  %v834 = vunpack.c.l.b16 %v815
  %v835 = vunpack.c.l.b16 %v816
  %v836 = vunpack.c.l.b16 %v817
  %v837 = vunpack.c.l.b16 %v818
  %v838 = vunpack.c.l.b16 %v819
  %v839 = vunpack.c.l.b16 %v820
  %v840 = vunpack.c.l.b16 %v821
  %v841 = vpack.c.b16 %v834, %v833
  %v842 = vpack.c.b16 %v836, %v835
  %v843 = vpack.c.b16 %v838, %v837
  %v844 = vpack.c.b16 %v840, %v839
  %vm849 = vcmask 523264
  %v851 = vsel %vm849, %v822, 0
  %853 = vmatpush.bf16.msra.mxu0 0
  %854 = vmatpush.bf16.msra.mxu0 0
  %855 = vmatpush.bf16.msra.mxu0 0
  %856 = vmatpush.bf16.msra.mxu0 0
  %857 = vmatpush.bf16.msra.mxu0 %v844
  %858 = vmatpush.bf16.msra.mxu0 %v843
  %859 = vmatpush.bf16.msra.mxu0 %v842
  %860 = vmatpush.bf16.msra.mxu0 %v841
  %861 = vmatmul.bf16.gmra.mxu0 %v851
  %v862 = vpop.f32.mrf.mxu0
  %v863 = vadd.f32 %v824, %v862
  %v864 = vpop.f32.mrf.mxu0
  %v865 = vadd.f32 %v824, %v864
  %866 = vdwg.mxu0
  %v867 = vadd.f32 %v706, %v863
  %v868 = vadd.f32 %v707, %v865
  %v869 = vld [vmem:[%s1 + $0x1] sm:$0x1]
  %v870 = vld [vmem:[%s2 + $0x1] sm:$0x1]
  %v871 = vsel %vm58, %v867, 0.0
  %872 = vadd.xlane.f32.xlu0 %v871
  %v873 = vpop.xlane.xlu0 %872
  %v874 = vsel %vm58, %v868, 0.0
  %875 = vadd.xlane.f32.xlu0 %v874
  %v876 = vpop.xlane.xlu0 %875
  %v877 = vmul.f32 %v873, %v71
  %v878 = vmul.f32 %v876, %v71
  %v879 = vsub.f32 %v867, %v877
  %v880 = vsub.f32 %v868, %v878
  %v881 = vmul.f32 %v879, %v879
  %v882 = vmul.f32 %v880, %v880
  %v883 = vsel %vm58, %v881, 0.0
  %884 = vadd.xlane.f32.xlu0 %v883
  %v885 = vpop.xlane.xlu0 %884
  %v886 = vsel %vm58, %v882, 0.0
  %887 = vadd.xlane.f32.xlu0 %v886
  %v888 = vpop.xlane.xlu0 %887
  %v889 = vmul.f32 %v885, %v71
  %v890 = vmul.f32 %v888, %v71
  %v891 = vadd.f32 %v889, 1e-05
  %v892 = vadd.f32 %v890, 1e-05
  %v893 = vrsqrt.pop %v891
  %v894 = vmul.f32 %v893, %v891
  %v895 = vmul.f32 %v894, %v893
  %v896 = vmul.f32 0.5, %v895
  %v897 = vsub.f32 1.5, %v896
  %v898 = vmul.f32 %v893, %v897
  %vm899 = vweird.f32 %v891
  %vm900 = vweird.f32 %v893
  %vm901 = vmor %vm899, %vm900
  %v902 = vsel %vm901, %v893, %v898
  %v903 = vrsqrt.pop %v892
  %v904 = vmul.f32 %v903, %v892
  %v905 = vmul.f32 %v904, %v903
  %v906 = vmul.f32 0.5, %v905
  %v907 = vsub.f32 1.5, %v906
  %v908 = vmul.f32 %v903, %v907
  %vm909 = vweird.f32 %v892
  %vm910 = vweird.f32 %v903
  %vm911 = vmor %vm909, %vm910
  %v912 = vsel %vm911, %v903, %v908
  %v913 = vmul.f32 %v879, %v902
  %v914 = vmul.f32 %v880, %v912
  %v915 = vperm.slane %v869, 0
  %v916 = vmul.f32 %v913, %v915
  %v917 = vmul.f32 %v914, %v915
  %v918 = vperm.slane %v870, 0
  %v919 = vadd.f32 %v916, %v918
  %v920 = vadd.f32 %v917, %v918
  %s921 = scalar_lea.vmem %s3, 16
  %v922 = vld [vmem:[%s921] sm:$0xf]
  %v923 = vld [vmem:[%s921 + $0x4] sm:$0xf]
  %v924 = vld [vmem:[%s921 + $0x8] sm:$0xf]
  %v925 = vld [vmem:[%s921 + $0xc] sm:$0xf]
  %v926 = vpack.c.bf16 %v920, %v919
  %v931 = vunpack.c.l.b16 %v922
  %v932 = vunpack.c.l.b16 %v923
  %v933 = vunpack.c.l.b16 %v924
  %v934 = vunpack.c.l.b16 %v925
  %v935 = vpack.c.b16 %v932, %v931
  %v936 = vpack.c.b16 %v934, %v933
  %v940 = vsel %vm58, %v926, 0
  %942 = vmatpush.bf16.msra.mxu0 0
  %943 = vmatpush.bf16.msra.mxu0 0
  %944 = vmatpush.bf16.msra.mxu0 0
  %945 = vmatpush.bf16.msra.mxu0 0
  %946 = vmatpush.bf16.msra.mxu0 0
  %947 = vmatpush.bf16.msra.mxu0 0
  %948 = vmatpush.bf16.msra.mxu0 %v936
  %949 = vmatpush.bf16.msra.mxu0 %v935
  %950 = vmatmul.bf16.gmra.mxu0 %v940
  %v951 = vpop.f32.mrf.mxu0
  %v952 = vadd.f32 0.0, %v951
  %v953 = vpop.f32.mrf.mxu0
  %v954 = vadd.f32 0.0, %v953
  %955 = vdwg.mxu0
  %958 = vrot.lane.b32.xlu0 %v952, 120
  %v959 = vpop.permute.xlu0 %958
  %960 = vrot.lane.b32.xlu0 %v954, 120
  %v961 = vpop.permute.xlu0 %960
  %964 = vrot.lane.b32.xlu0 %v952, 112
  %v965 = vpop.permute.xlu0 %964
  %966 = vrot.lane.b32.xlu0 %v954, 112
  %v967 = vpop.permute.xlu0 %966
  %970 = vrot.lane.b32.xlu0 %v952, 104
  %v971 = vpop.permute.xlu0 %970
  %972 = vrot.lane.b32.xlu0 %v954, 104
  %v973 = vpop.permute.xlu0 %972
  %v976 = vpack.c.bf16 %v952, %v952
  %v977 = vpack.c.bf16 %v954, %v954
  %v978 = vpack.c.bf16 %v959, %v959
  %v979 = vpack.c.bf16 %v961, %v961
  %v980 = vpack.c.bf16 %v965, %v965
  %v981 = vpack.c.bf16 %v967, %v967
  %v982 = vpack.c.bf16 %v971, %v971
  %v983 = vpack.c.bf16 %v973, %v973
  %v985 = vunpack.c.l.b16 %v976
  %v986 = vpack.c.b16 %v985, %v985
  %987 = vrot.lane.b32.xlu0 %v986, 96
  %v988 = vpop.permute.xlu0 %987
  %v990 = vsel %vm183, %v976, 0
  %v993 = vsel %vm183, %v988, 0
  %995 = vmatpush.bf16.xpose.msra.mxu0 0
  %996 = vmatpush.bf16.xpose.msra.mxu0 0
  %997 = vmatpush.bf16.xpose.msra.mxu0 0
  %998 = vmatpush.bf16.xpose.msra.mxu0 0
  %999 = vmatpush.bf16.xpose.msra.mxu0 0
  %1000 = vmatpush.bf16.xpose.msra.mxu0 0
  %1001 = vmatpush.bf16.xpose.msra.mxu0 0
  %1002 = vmatpush.bf16.xpose.msra.mxu0 %v993
  %1003 = vmatmul.bf16.gmra.mxu0 %v990
  %v1004 = vpop.f32.mrf.mxu0
  %v1005 = vadd.f32 0.0, %v1004
  %v1006 = vpop.f32.mrf.mxu0
  %1007 = vdwg.mxu0
  %v1009 = vunpack.c.l.b16 %v977
  %v1010 = vpack.c.b16 %v1009, %v1009
  %1011 = vrot.lane.b32.xlu0 %v1010, 96
  %v1012 = vpop.permute.xlu0 %1011
  %v1014 = vsel %vm183, %v977, 0
  %v1017 = vsel %vm183, %v1012, 0
  %1019 = vmatpush.bf16.xpose.msra.mxu0 0
  %1020 = vmatpush.bf16.xpose.msra.mxu0 0
  %1021 = vmatpush.bf16.xpose.msra.mxu0 0
  %1022 = vmatpush.bf16.xpose.msra.mxu0 0
  %1023 = vmatpush.bf16.xpose.msra.mxu0 0
  %1024 = vmatpush.bf16.xpose.msra.mxu0 0
  %1025 = vmatpush.bf16.xpose.msra.mxu0 0
  %1026 = vmatpush.bf16.xpose.msra.mxu0 %v1017
  %1027 = vmatmul.bf16.gmra.mxu0 %v1014
  %v1028 = vpop.f32.mrf.mxu0
  %v1029 = vadd.f32 0.0, %v1028
  %v1030 = vpop.f32.mrf.mxu0
  %1031 = vdwg.mxu0
  %v1033 = vunpack.c.l.b16 %v978
  %v1034 = vpack.c.b16 %v1033, %v1033
  %1035 = vrot.lane.b32.xlu0 %v1034, 96
  %v1036 = vpop.permute.xlu0 %1035
  %v1038 = vsel %vm183, %v978, 0
  %v1041 = vsel %vm183, %v1036, 0
  %1043 = vmatpush.bf16.xpose.msra.mxu0 0
  %1044 = vmatpush.bf16.xpose.msra.mxu0 0
  %1045 = vmatpush.bf16.xpose.msra.mxu0 0
  %1046 = vmatpush.bf16.xpose.msra.mxu0 0
  %1047 = vmatpush.bf16.xpose.msra.mxu0 0
  %1048 = vmatpush.bf16.xpose.msra.mxu0 0
  %1049 = vmatpush.bf16.xpose.msra.mxu0 0
  %1050 = vmatpush.bf16.xpose.msra.mxu0 %v1041
  %1051 = vmatmul.bf16.gmra.mxu0 %v1038
  %v1052 = vpop.f32.mrf.mxu0
  %v1053 = vadd.f32 0.0, %v1052
  %v1054 = vpop.f32.mrf.mxu0
  %1055 = vdwg.mxu0
  %v1057 = vunpack.c.l.b16 %v979
  %v1058 = vpack.c.b16 %v1057, %v1057
  %1059 = vrot.lane.b32.xlu0 %v1058, 96
  %v1060 = vpop.permute.xlu0 %1059
  %v1062 = vsel %vm183, %v979, 0
  %v1065 = vsel %vm183, %v1060, 0
  %1067 = vmatpush.bf16.xpose.msra.mxu0 0
  %1068 = vmatpush.bf16.xpose.msra.mxu0 0
  %1069 = vmatpush.bf16.xpose.msra.mxu0 0
  %1070 = vmatpush.bf16.xpose.msra.mxu0 0
  %1071 = vmatpush.bf16.xpose.msra.mxu0 0
  %1072 = vmatpush.bf16.xpose.msra.mxu0 0
  %1073 = vmatpush.bf16.xpose.msra.mxu0 0
  %1074 = vmatpush.bf16.xpose.msra.mxu0 %v1065
  %1075 = vmatmul.bf16.gmra.mxu0 %v1062
  %v1076 = vpop.f32.mrf.mxu0
  %v1077 = vadd.f32 0.0, %v1076
  %v1078 = vpop.f32.mrf.mxu0
  %1079 = vdwg.mxu0
  %v1081 = vunpack.c.l.b16 %v980
  %v1082 = vpack.c.b16 %v1081, %v1081
  %1083 = vrot.lane.b32.xlu0 %v1082, 96
  %v1084 = vpop.permute.xlu0 %1083
  %v1086 = vsel %vm183, %v980, 0
  %v1089 = vsel %vm183, %v1084, 0
  %1091 = vmatpush.bf16.xpose.msra.mxu0 0
  %1092 = vmatpush.bf16.xpose.msra.mxu0 0
  %1093 = vmatpush.bf16.xpose.msra.mxu0 0
  %1094 = vmatpush.bf16.xpose.msra.mxu0 0
  %1095 = vmatpush.bf16.xpose.msra.mxu0 0
  %1096 = vmatpush.bf16.xpose.msra.mxu0 0
  %1097 = vmatpush.bf16.xpose.msra.mxu0 0
  %1098 = vmatpush.bf16.xpose.msra.mxu0 %v1089
  %1099 = vmatmul.bf16.gmra.mxu0 %v1086
  %v1100 = vpop.f32.mrf.mxu0
  %v1101 = vadd.f32 0.0, %v1100
  %v1102 = vpop.f32.mrf.mxu0
  %1103 = vdwg.mxu0
  %v1105 = vunpack.c.l.b16 %v981
  %v1106 = vpack.c.b16 %v1105, %v1105
  %1107 = vrot.lane.b32.xlu0 %v1106, 96
  %v1108 = vpop.permute.xlu0 %1107
  %v1110 = vsel %vm183, %v981, 0
  %v1113 = vsel %vm183, %v1108, 0
  %1115 = vmatpush.bf16.xpose.msra.mxu0 0
  %1116 = vmatpush.bf16.xpose.msra.mxu0 0
  %1117 = vmatpush.bf16.xpose.msra.mxu0 0
  %1118 = vmatpush.bf16.xpose.msra.mxu0 0
  %1119 = vmatpush.bf16.xpose.msra.mxu0 0
  %1120 = vmatpush.bf16.xpose.msra.mxu0 0
  %1121 = vmatpush.bf16.xpose.msra.mxu0 0
  %1122 = vmatpush.bf16.xpose.msra.mxu0 %v1113
  %1123 = vmatmul.bf16.gmra.mxu0 %v1110
  %v1124 = vpop.f32.mrf.mxu0
  %v1125 = vadd.f32 0.0, %v1124
  %v1126 = vpop.f32.mrf.mxu0
  %1127 = vdwg.mxu0
  %v1129 = vunpack.c.l.b16 %v982
  %v1130 = vpack.c.b16 %v1129, %v1129
  %1131 = vrot.lane.b32.xlu0 %v1130, 96
  %v1132 = vpop.permute.xlu0 %1131
  %v1134 = vsel %vm183, %v982, 0
  %v1137 = vsel %vm183, %v1132, 0
  %1139 = vmatpush.bf16.xpose.msra.mxu0 0
  %1140 = vmatpush.bf16.xpose.msra.mxu0 0
  %1141 = vmatpush.bf16.xpose.msra.mxu0 0
  %1142 = vmatpush.bf16.xpose.msra.mxu0 0
  %1143 = vmatpush.bf16.xpose.msra.mxu0 0
  %1144 = vmatpush.bf16.xpose.msra.mxu0 0
  %1145 = vmatpush.bf16.xpose.msra.mxu0 0
  %1146 = vmatpush.bf16.xpose.msra.mxu0 %v1137
  %1147 = vmatmul.bf16.gmra.mxu0 %v1134
  %v1148 = vpop.f32.mrf.mxu0
  %v1149 = vadd.f32 0.0, %v1148
  %v1150 = vpop.f32.mrf.mxu0
  %1151 = vdwg.mxu0
  %v1153 = vunpack.c.l.b16 %v983
  %v1154 = vpack.c.b16 %v1153, %v1153
  %1155 = vrot.lane.b32.xlu0 %v1154, 96
  %v1156 = vpop.permute.xlu0 %1155
  %v1158 = vsel %vm183, %v983, 0
  %v1161 = vsel %vm183, %v1156, 0
  %1163 = vmatpush.bf16.xpose.msra.mxu0 0
  %1164 = vmatpush.bf16.xpose.msra.mxu0 0
  %1165 = vmatpush.bf16.xpose.msra.mxu0 0
  %1166 = vmatpush.bf16.xpose.msra.mxu0 0
  %1167 = vmatpush.bf16.xpose.msra.mxu0 0
  %1168 = vmatpush.bf16.xpose.msra.mxu0 0
  %1169 = vmatpush.bf16.xpose.msra.mxu0 0
  %1170 = vmatpush.bf16.xpose.msra.mxu0 %v1161
  %1171 = vmatmul.bf16.gmra.mxu0 %v1158
  %v1172 = vpop.f32.mrf.mxu0
  %v1173 = vadd.f32 0.0, %v1172
  %v1174 = vpop.f32.mrf.mxu0
  %1175 = vdwg.mxu0
  %v1176 = vsel %vm183, %v1005, -inf
  %1177 = vmax.xlane.f32.xlu0 %v1176
  %v1178 = vpop.xlane.xlu0 %1177
  %v1179 = vsel %vm183, %v1029, -inf
  %1180 = vmax.xlane.f32.xlu0 %v1179
  %v1181 = vpop.xlane.xlu0 %1180
  %v1182 = vsel %vm183, %v1053, -inf
  %1183 = vmax.xlane.f32.xlu0 %v1182
  %v1184 = vpop.xlane.xlu0 %1183
  %v1185 = vsel %vm183, %v1077, -inf
  %1186 = vmax.xlane.f32.xlu0 %v1185
  %v1187 = vpop.xlane.xlu0 %1186
  %v1188 = vsel %vm183, %v1101, -inf
  %1189 = vmax.xlane.f32.xlu0 %v1188
  %v1190 = vpop.xlane.xlu0 %1189
  %v1191 = vsel %vm183, %v1125, -inf
  %1192 = vmax.xlane.f32.xlu0 %v1191
  %v1193 = vpop.xlane.xlu0 %1192
  %v1194 = vsel %vm183, %v1149, -inf
  %1195 = vmax.xlane.f32.xlu0 %v1194
  %v1196 = vpop.xlane.xlu0 %1195
  %v1197 = vsel %vm183, %v1173, -inf
  %1198 = vmax.xlane.f32.xlu0 %v1197
  %v1199 = vpop.xlane.xlu0 %1198
  %v1200 = vsub.f32 %v1005, %v1178
  %v1201 = vsub.f32 %v1029, %v1181
  %v1202 = vsub.f32 %v1053, %v1184
  %v1203 = vsub.f32 %v1077, %v1187
  %v1204 = vsub.f32 %v1101, %v1190
  %v1205 = vsub.f32 %v1125, %v1193
  %v1206 = vsub.f32 %v1149, %v1196
  %v1207 = vsub.f32 %v1173, %v1199
  %v1208 = vmul.f32 %v1200, 1.442695
  %v1209 = vpow.pop %v1208
  %v1210 = vmul.f32 %v1201, 1.442695
  %v1211 = vpow.pop %v1210
  %v1212 = vmul.f32 %v1202, 1.442695
  %v1213 = vpow.pop %v1212
  %v1214 = vmul.f32 %v1203, 1.442695
  %v1215 = vpow.pop %v1214
  %v1216 = vmul.f32 %v1204, 1.442695
  %v1217 = vpow.pop %v1216
  %v1218 = vmul.f32 %v1205, 1.442695
  %v1219 = vpow.pop %v1218
  %v1220 = vmul.f32 %v1206, 1.442695
  %v1221 = vpow.pop %v1220
  %v1222 = vmul.f32 %v1207, 1.442695
  %v1223 = vpow.pop %v1222
  %v1224 = vsel %vm183, %v1209, 0.0
  %1225 = vadd.xlane.f32.xlu0 %v1224
  %v1226 = vpop.xlane.xlu0 %1225
  %v1227 = vsel %vm183, %v1211, 0.0
  %1228 = vadd.xlane.f32.xlu0 %v1227
  %v1229 = vpop.xlane.xlu0 %1228
  %v1230 = vsel %vm183, %v1213, 0.0
  %1231 = vadd.xlane.f32.xlu0 %v1230
  %v1232 = vpop.xlane.xlu0 %1231
  %v1233 = vsel %vm183, %v1215, 0.0
  %1234 = vadd.xlane.f32.xlu0 %v1233
  %v1235 = vpop.xlane.xlu0 %1234
  %v1236 = vsel %vm183, %v1217, 0.0
  %1237 = vadd.xlane.f32.xlu0 %v1236
  %v1238 = vpop.xlane.xlu0 %1237
  %v1239 = vsel %vm183, %v1219, 0.0
  %1240 = vadd.xlane.f32.xlu0 %v1239
  %v1241 = vpop.xlane.xlu0 %1240
  %v1242 = vsel %vm183, %v1221, 0.0
  %1243 = vadd.xlane.f32.xlu0 %v1242
  %v1244 = vpop.xlane.xlu0 %1243
  %v1245 = vsel %vm183, %v1223, 0.0
  %1246 = vadd.xlane.f32.xlu0 %v1245
  %v1247 = vpop.xlane.xlu0 %1246
  %v1248 = vrcp.pop %v1226
  %v1249 = vrcp.pop %v1229
  %v1250 = vrcp.pop %v1232
  %v1251 = vrcp.pop %v1235
  %v1252 = vrcp.pop %v1238
  %v1253 = vrcp.pop %v1241
  %v1254 = vrcp.pop %v1244
  %v1255 = vrcp.pop %v1247
  %v1256 = vmul.f32 %v1209, %v1248
  %v1257 = vmul.f32 %v1211, %v1249
  %v1258 = vmul.f32 %v1213, %v1250
  %v1259 = vmul.f32 %v1215, %v1251
  %v1260 = vmul.f32 %v1217, %v1252
  %v1261 = vmul.f32 %v1219, %v1253
  %v1262 = vmul.f32 %v1221, %v1254
  %v1263 = vmul.f32 %v1223, %v1255
  %v1264 = vpack.c.bf16 %v1256, %v1256
  %v1265 = vpack.c.bf16 %v1257, %v1257
  %v1266 = vpack.c.bf16 %v1258, %v1258
  %v1267 = vpack.c.bf16 %v1259, %v1259
  %v1268 = vpack.c.bf16 %v1260, %v1260
  %v1269 = vpack.c.bf16 %v1261, %v1261
  %v1270 = vpack.c.bf16 %v1262, %v1262
  %v1271 = vpack.c.bf16 %v1263, %v1263
  %1272 = vrot.lane.b32.xlu0 %v986, 64
  %v1273 = vpop.permute.xlu0 %1272
  %v1275 = vsel %vm183, %v1264, 0
  %v1278 = vsel %vm472, %v1273, 0
  %1280 = vmatpush.bf16.msra.mxu0 0
  %1281 = vmatpush.bf16.msra.mxu0 0
  %1282 = vmatpush.bf16.msra.mxu0 0
  %1283 = vmatpush.bf16.msra.mxu0 0
  %1284 = vmatpush.bf16.msra.mxu0 0
  %1285 = vmatpush.bf16.msra.mxu0 0
  %1286 = vmatpush.bf16.msra.mxu0 0
  %1287 = vmatpush.bf16.msra.mxu0 %v1278
  %1288 = vmatmul.bf16.gmra.mxu0 %v1275
  %v1289 = vpop.f32.mrf.mxu0
  %v1290 = vadd.f32 0.0, %v1289
  %v1291 = vpop.f32.mrf.mxu0
  %1292 = vdwg.mxu0
  %1293 = vrot.lane.b32.xlu0 %v1010, 64
  %v1294 = vpop.permute.xlu0 %1293
  %v1296 = vsel %vm183, %v1265, 0
  %v1299 = vsel %vm472, %v1294, 0
  %1301 = vmatpush.bf16.msra.mxu0 0
  %1302 = vmatpush.bf16.msra.mxu0 0
  %1303 = vmatpush.bf16.msra.mxu0 0
  %1304 = vmatpush.bf16.msra.mxu0 0
  %1305 = vmatpush.bf16.msra.mxu0 0
  %1306 = vmatpush.bf16.msra.mxu0 0
  %1307 = vmatpush.bf16.msra.mxu0 0
  %1308 = vmatpush.bf16.msra.mxu0 %v1299
  %1309 = vmatmul.bf16.gmra.mxu0 %v1296
  %v1310 = vpop.f32.mrf.mxu0
  %v1311 = vadd.f32 0.0, %v1310
  %v1312 = vpop.f32.mrf.mxu0
  %1313 = vdwg.mxu0
  %1314 = vrot.lane.b32.xlu0 %v1034, 64
  %v1315 = vpop.permute.xlu0 %1314
  %v1317 = vsel %vm183, %v1266, 0
  %v1320 = vsel %vm472, %v1315, 0
  %1322 = vmatpush.bf16.msra.mxu0 0
  %1323 = vmatpush.bf16.msra.mxu0 0
  %1324 = vmatpush.bf16.msra.mxu0 0
  %1325 = vmatpush.bf16.msra.mxu0 0
  %1326 = vmatpush.bf16.msra.mxu0 0
  %1327 = vmatpush.bf16.msra.mxu0 0
  %1328 = vmatpush.bf16.msra.mxu0 0
  %1329 = vmatpush.bf16.msra.mxu0 %v1320
  %1330 = vmatmul.bf16.gmra.mxu0 %v1317
  %v1331 = vpop.f32.mrf.mxu0
  %v1332 = vadd.f32 0.0, %v1331
  %v1333 = vpop.f32.mrf.mxu0
  %1334 = vdwg.mxu0
  %1335 = vrot.lane.b32.xlu0 %v1058, 64
  %v1336 = vpop.permute.xlu0 %1335
  %v1338 = vsel %vm183, %v1267, 0
  %v1341 = vsel %vm472, %v1336, 0
  %1343 = vmatpush.bf16.msra.mxu0 0
  %1344 = vmatpush.bf16.msra.mxu0 0
  %1345 = vmatpush.bf16.msra.mxu0 0
  %1346 = vmatpush.bf16.msra.mxu0 0
  %1347 = vmatpush.bf16.msra.mxu0 0
  %1348 = vmatpush.bf16.msra.mxu0 0
  %1349 = vmatpush.bf16.msra.mxu0 0
  %1350 = vmatpush.bf16.msra.mxu0 %v1341
  %1351 = vmatmul.bf16.gmra.mxu0 %v1338
  %v1352 = vpop.f32.mrf.mxu0
  %v1353 = vadd.f32 0.0, %v1352
  %v1354 = vpop.f32.mrf.mxu0
  %1355 = vdwg.mxu0
  %1356 = vrot.lane.b32.xlu0 %v1082, 64
  %v1357 = vpop.permute.xlu0 %1356
  %v1359 = vsel %vm183, %v1268, 0
  %v1362 = vsel %vm472, %v1357, 0
  %1364 = vmatpush.bf16.msra.mxu0 0
  %1365 = vmatpush.bf16.msra.mxu0 0
  %1366 = vmatpush.bf16.msra.mxu0 0
  %1367 = vmatpush.bf16.msra.mxu0 0
  %1368 = vmatpush.bf16.msra.mxu0 0
  %1369 = vmatpush.bf16.msra.mxu0 0
  %1370 = vmatpush.bf16.msra.mxu0 0
  %1371 = vmatpush.bf16.msra.mxu0 %v1362
  %1372 = vmatmul.bf16.gmra.mxu0 %v1359
  %v1373 = vpop.f32.mrf.mxu0
  %v1374 = vadd.f32 0.0, %v1373
  %v1375 = vpop.f32.mrf.mxu0
  %1376 = vdwg.mxu0
  %1377 = vrot.lane.b32.xlu0 %v1106, 64
  %v1378 = vpop.permute.xlu0 %1377
  %v1380 = vsel %vm183, %v1269, 0
  %v1383 = vsel %vm472, %v1378, 0
  %1385 = vmatpush.bf16.msra.mxu0 0
  %1386 = vmatpush.bf16.msra.mxu0 0
  %1387 = vmatpush.bf16.msra.mxu0 0
  %1388 = vmatpush.bf16.msra.mxu0 0
  %1389 = vmatpush.bf16.msra.mxu0 0
  %1390 = vmatpush.bf16.msra.mxu0 0
  %1391 = vmatpush.bf16.msra.mxu0 0
  %1392 = vmatpush.bf16.msra.mxu0 %v1383
  %1393 = vmatmul.bf16.gmra.mxu0 %v1380
  %v1394 = vpop.f32.mrf.mxu0
  %v1395 = vadd.f32 0.0, %v1394
  %v1396 = vpop.f32.mrf.mxu0
  %1397 = vdwg.mxu0
  %1398 = vrot.lane.b32.xlu0 %v1130, 64
  %v1399 = vpop.permute.xlu0 %1398
  %v1401 = vsel %vm183, %v1270, 0
  %v1404 = vsel %vm472, %v1399, 0
  %1406 = vmatpush.bf16.msra.mxu0 0
  %1407 = vmatpush.bf16.msra.mxu0 0
  %1408 = vmatpush.bf16.msra.mxu0 0
  %1409 = vmatpush.bf16.msra.mxu0 0
  %1410 = vmatpush.bf16.msra.mxu0 0
  %1411 = vmatpush.bf16.msra.mxu0 0
  %1412 = vmatpush.bf16.msra.mxu0 0
  %1413 = vmatpush.bf16.msra.mxu0 %v1404
  %1414 = vmatmul.bf16.gmra.mxu0 %v1401
  %v1415 = vpop.f32.mrf.mxu0
  %v1416 = vadd.f32 0.0, %v1415
  %v1417 = vpop.f32.mrf.mxu0
  %1418 = vdwg.mxu0
  %1419 = vrot.lane.b32.xlu0 %v1154, 64
  %v1420 = vpop.permute.xlu0 %1419
  %v1422 = vsel %vm183, %v1271, 0
  %v1425 = vsel %vm472, %v1420, 0
  %1427 = vmatpush.bf16.msra.mxu0 0
  %1428 = vmatpush.bf16.msra.mxu0 0
  %1429 = vmatpush.bf16.msra.mxu0 0
  %1430 = vmatpush.bf16.msra.mxu0 0
  %1431 = vmatpush.bf16.msra.mxu0 0
  %1432 = vmatpush.bf16.msra.mxu0 0
  %1433 = vmatpush.bf16.msra.mxu0 0
  %1434 = vmatpush.bf16.msra.mxu0 %v1425
  %1435 = vmatmul.bf16.gmra.mxu0 %v1422
  %v1436 = vpop.f32.mrf.mxu0
  %v1437 = vadd.f32 0.0, %v1436
  %v1438 = vpop.f32.mrf.mxu0
  %1439 = vdwg.mxu0
  %1442 = vrot.lane.b32.xlu0 %v1332, 8
  %v1443 = vpop.permute.xlu0 %1442
  %1444 = vrot.lane.b32.xlu0 %v1353, 8
  %v1445 = vpop.permute.xlu0 %1444
  %1450 = vrot.lane.b32.xlu0 %v1374, 16
  %v1451 = vpop.permute.xlu0 %1450
  %1452 = vrot.lane.b32.xlu0 %v1395, 16
  %v1453 = vpop.permute.xlu0 %1452
  %1458 = vrot.lane.b32.xlu0 %v1416, 24
  %v1459 = vpop.permute.xlu0 %1458
  %1460 = vrot.lane.b32.xlu0 %v1437, 24
  %v1461 = vpop.permute.xlu0 %1460
  %v1464 = vsel %vm183, %v1290, %v1443
  %v1465 = vsel %vm183, %v1311, %v1445
  %v1466 = vsel %vm662, %v1464, %v1451
  %v1467 = vsel %vm662, %v1465, %v1453
  %v1468 = vsel %vm665, %v1466, %v1459
  %v1469 = vsel %vm665, %v1467, %v1461
  %s1470 = scalar_lea.vmem %s4, 16
  %v1471 = vld [vmem:[%s1470] sm:$0xf]
  %v1472 = vld [vmem:[%s1470 + $0x4] sm:$0xf]
  %v1473 = vld [vmem:[%s1470 + $0x8] sm:$0xf]
  %v1474 = vld [vmem:[%s1470 + $0xc] sm:$0xf]
  %v1475 = vpack.c.bf16 %v1469, %v1468
  %v1480 = vunpack.c.l.b16 %v1471
  %v1481 = vunpack.c.l.b16 %v1472
  %v1482 = vunpack.c.l.b16 %v1473
  %v1483 = vunpack.c.l.b16 %v1474
  %v1484 = vpack.c.b16 %v1481, %v1480
  %v1485 = vpack.c.b16 %v1483, %v1482
  %v1489 = vsel %vm58, %v1475, 0
  %1491 = vmatpush.bf16.msra.mxu0 0
  %1492 = vmatpush.bf16.msra.mxu0 0
  %1493 = vmatpush.bf16.msra.mxu0 0
  %1494 = vmatpush.bf16.msra.mxu0 0
  %1495 = vmatpush.bf16.msra.mxu0 0
  %1496 = vmatpush.bf16.msra.mxu0 0
  %1497 = vmatpush.bf16.msra.mxu0 %v1485
  %1498 = vmatpush.bf16.msra.mxu0 %v1484
  %1499 = vmatmul.bf16.gmra.mxu0 %v1489
  %v1500 = vpop.f32.mrf.mxu0
  %v1501 = vadd.f32 0.0, %v1500
  %v1502 = vpop.f32.mrf.mxu0
  %v1503 = vadd.f32 0.0, %v1502
  %1504 = vdwg.mxu0
  %v1505 = vadd.f32 %v867, %v1501
  %v1506 = vadd.f32 %v868, %v1503
  %v1507 = vld [vmem:[%s5 + $0x1] sm:$0x1]
  %v1508 = vperm.slane %v1507, 0
  %v1509 = vadd.f32 %v1505, %v1508
  %v1510 = vadd.f32 %v1506, %v1508
  %v1511 = vld [vmem:[%s6 + $0x1] sm:$0x1]
  %v1512 = vld [vmem:[%s7 + $0x1] sm:$0x1]
  %v1513 = vsel %vm58, %v1509, 0.0
  %1514 = vadd.xlane.f32.xlu0 %v1513
  %v1515 = vpop.xlane.xlu0 %1514
  %v1516 = vsel %vm58, %v1510, 0.0
  %1517 = vadd.xlane.f32.xlu0 %v1516
  %v1518 = vpop.xlane.xlu0 %1517
  %v1519 = vmul.f32 %v1515, %v71
  %v1520 = vmul.f32 %v1518, %v71
  %v1521 = vsub.f32 %v1509, %v1519
  %v1522 = vsub.f32 %v1510, %v1520
  %v1523 = vmul.f32 %v1521, %v1521
  %v1524 = vmul.f32 %v1522, %v1522
  %v1525 = vsel %vm58, %v1523, 0.0
  %1526 = vadd.xlane.f32.xlu0 %v1525
  %v1527 = vpop.xlane.xlu0 %1526
  %v1528 = vsel %vm58, %v1524, 0.0
  %1529 = vadd.xlane.f32.xlu0 %v1528
  %v1530 = vpop.xlane.xlu0 %1529
  %v1531 = vmul.f32 %v1527, %v71
  %v1532 = vmul.f32 %v1530, %v71
  %v1533 = vadd.f32 %v1531, 1e-05
  %v1534 = vadd.f32 %v1532, 1e-05
  %v1535 = vrsqrt.pop %v1533
  %v1536 = vmul.f32 %v1535, %v1533
  %v1537 = vmul.f32 %v1536, %v1535
  %v1538 = vmul.f32 0.5, %v1537
  %v1539 = vsub.f32 1.5, %v1538
  %v1540 = vmul.f32 %v1535, %v1539
  %vm1541 = vweird.f32 %v1533
  %vm1542 = vweird.f32 %v1535
  %vm1543 = vmor %vm1541, %vm1542
  %v1544 = vsel %vm1543, %v1535, %v1540
  %v1545 = vrsqrt.pop %v1534
  %v1546 = vmul.f32 %v1545, %v1534
  %v1547 = vmul.f32 %v1546, %v1545
  %v1548 = vmul.f32 0.5, %v1547
  %v1549 = vsub.f32 1.5, %v1548
  %v1550 = vmul.f32 %v1545, %v1549
  %vm1551 = vweird.f32 %v1534
  %vm1552 = vweird.f32 %v1545
  %vm1553 = vmor %vm1551, %vm1552
  %v1554 = vsel %vm1553, %v1545, %v1550
  %v1555 = vmul.f32 %v1521, %v1544
  %v1556 = vmul.f32 %v1522, %v1554
  %v1557 = vperm.slane %v1511, 0
  %v1558 = vmul.f32 %v1555, %v1557
  %v1559 = vmul.f32 %v1556, %v1557
  %v1560 = vperm.slane %v1512, 0
  %v1561 = vadd.f32 %v1558, %v1560
  %v1562 = vadd.f32 %v1559, %v1560
  %s1563 = scalar_lea.vmem %s8, 16
  %v1564 = vld [vmem:[%s1563] sm:$0xf]
  %v1565 = vld [vmem:[%s1563 + $0x4] sm:$0xf]
  %v1566 = vld [vmem:[%s1563 + $0x8] sm:$0xf]
  %v1567 = vld [vmem:[%s1563 + $0xc] sm:$0xf]
  %v1568 = vpack.c.bf16 %v1562, %v1561
  %v1569 = vld [vmem:[%s9 + $0x1] sm:$0x1]
  %v1570 = vperm.slane %v1569, 0
  %v1575 = vunpack.c.l.b16 %v1564
  %v1576 = vunpack.c.l.b16 %v1565
  %v1577 = vunpack.c.l.b16 %v1566
  %v1578 = vunpack.c.l.b16 %v1567
  %v1579 = vpack.c.b16 %v1576, %v1575
  %v1580 = vpack.c.b16 %v1578, %v1577
  %v1584 = vsel %vm58, %v1568, 0
  %1586 = vmatpush.bf16.msra.mxu0 0
  %1587 = vmatpush.bf16.msra.mxu0 0
  %1588 = vmatpush.bf16.msra.mxu0 0
  %1589 = vmatpush.bf16.msra.mxu0 0
  %1590 = vmatpush.bf16.msra.mxu0 0
  %1591 = vmatpush.bf16.msra.mxu0 0
  %1592 = vmatpush.bf16.msra.mxu0 %v1580
  %1593 = vmatpush.bf16.msra.mxu0 %v1579
  %1594 = vmatmul.bf16.gmra.mxu0 %v1584
  %v1595 = vpop.f32.mrf.mxu0
  %v1596 = vadd.f32 %v1570, %v1595
  %v1597 = vpop.f32.mrf.mxu0
  %v1598 = vadd.f32 %v1570, %v1597
  %1599 = vdwg.mxu0
  %v1600 = vmul.f32 %v1596, %v1596
  %v1601 = vmul.f32 %v1598, %v1598
  %v1602 = vmul.f32 %v1596, %v1600
  %v1603 = vmul.f32 %v1598, %v1601
  %v1604 = vmul.f32 %v1602, 0.044715
  %v1605 = vmul.f32 %v1603, 0.044715
  %v1606 = vadd.f32 %v1596, %v1604
  %v1607 = vadd.f32 %v1598, %v1605
  %v1608 = vmul.f32 %v1606, 0.7978846
  %v1609 = vmul.f32 %v1607, 0.7978846
  %v1610 = vtanh.pop %v1608
  %v1611 = vtanh.pop %v1609
  %v1612 = vadd.f32 %v1610, 1.0
  %v1613 = vadd.f32 %v1611, 1.0
  %v1614 = vmul.f32 %v1612, 0.5
  %v1615 = vmul.f32 %v1613, 0.5
  %v1616 = vmul.f32 %v1596, %v1614
  %v1617 = vmul.f32 %v1598, %v1615
  %s1618 = scalar_lea.vmem %s10, 32
  %v1619 = vld [vmem:[%s1618] sm:$0xf]
  %v1620 = vld [vmem:[%s1618 + $0x4] sm:$0xf]
  %v1621 = vld [vmem:[%s1618 + $0x8] sm:$0xf]
  %v1622 = vld [vmem:[%s1618 + $0xc] sm:$0xf]
  %v1623 = vld [vmem:[%s1618 + $0x10] sm:$0xf]
  %v1624 = vld [vmem:[%s1618 + $0x14] sm:$0xf]
  %v1625 = vld [vmem:[%s1618 + $0x18] sm:$0xf]
  %v1626 = vld [vmem:[%s1618 + $0x1c] sm:$0xf]
  %v1627 = vpack.c.bf16 %v1617, %v1616
  %v1628 = vld [vmem:[%s11 + $0x1] sm:$0x1]
  %v1629 = vperm.slane %v1628, 0
  %v1638 = vunpack.c.l.b16 %v1619
  %v1639 = vunpack.c.l.b16 %v1620
  %v1640 = vunpack.c.l.b16 %v1621
  %v1641 = vunpack.c.l.b16 %v1622
  %v1642 = vunpack.c.l.b16 %v1623
  %v1643 = vunpack.c.l.b16 %v1624
  %v1644 = vunpack.c.l.b16 %v1625
  %v1645 = vunpack.c.l.b16 %v1626
  %v1646 = vpack.c.b16 %v1639, %v1638
  %v1647 = vpack.c.b16 %v1641, %v1640
  %v1648 = vpack.c.b16 %v1643, %v1642
  %v1649 = vpack.c.b16 %v1645, %v1644
  %v1655 = vsel %vm849, %v1627, 0
  %1657 = vmatpush.bf16.msra.mxu0 0
  %1658 = vmatpush.bf16.msra.mxu0 0
  %1659 = vmatpush.bf16.msra.mxu0 0
  %1660 = vmatpush.bf16.msra.mxu0 0
  %1661 = vmatpush.bf16.msra.mxu0 %v1649
  %1662 = vmatpush.bf16.msra.mxu0 %v1648
  %1663 = vmatpush.bf16.msra.mxu0 %v1647
  %1664 = vmatpush.bf16.msra.mxu0 %v1646
  %1665 = vmatmul.bf16.gmra.mxu0 %v1655
  %v1666 = vpop.f32.mrf.mxu0
  %v1667 = vadd.f32 %v1629, %v1666
  %v1668 = vpop.f32.mrf.mxu0
  %v1669 = vadd.f32 %v1629, %v1668
  %1670 = vdwg.mxu0
  %v1671 = vadd.f32 %v1509, %v1667
  %v1672 = vadd.f32 %v1510, %v1669
  %v1673 = vld [vmem:[%s12] sm:$0x1]
  %v1674 = vld [vmem:[%s13] sm:$0x1]
  %v1675 = vsel %vm58, %v1671, 0.0
  %1676 = vadd.xlane.f32.xlu0 %v1675
  %v1677 = vpop.xlane.xlu0 %1676
  %v1678 = vsel %vm58, %v1672, 0.0
  %1679 = vadd.xlane.f32.xlu0 %v1678
  %v1680 = vpop.xlane.xlu0 %1679
  %v1681 = vmul.f32 %v1677, %v71
  %v1682 = vmul.f32 %v1680, %v71
  %v1683 = vsub.f32 %v1671, %v1681
  %v1684 = vsub.f32 %v1672, %v1682
  %v1685 = vmul.f32 %v1683, %v1683
  %v1686 = vmul.f32 %v1684, %v1684
  %v1687 = vsel %vm58, %v1685, 0.0
  %1688 = vadd.xlane.f32.xlu0 %v1687
  %v1689 = vpop.xlane.xlu0 %1688
  %v1690 = vsel %vm58, %v1686, 0.0
  %1691 = vadd.xlane.f32.xlu0 %v1690
  %v1692 = vpop.xlane.xlu0 %1691
  %v1693 = vmul.f32 %v1689, %v71
  %v1694 = vmul.f32 %v1692, %v71
  %v1695 = vadd.f32 %v1693, 1e-05
  %v1696 = vadd.f32 %v1694, 1e-05
  %v1697 = vrsqrt.pop %v1695
  %v1698 = vmul.f32 %v1697, %v1695
  %v1699 = vmul.f32 %v1698, %v1697
  %v1700 = vmul.f32 0.5, %v1699
  %v1701 = vsub.f32 1.5, %v1700
  %v1702 = vmul.f32 %v1697, %v1701
  %vm1703 = vweird.f32 %v1695
  %vm1704 = vweird.f32 %v1697
  %vm1705 = vmor %vm1703, %vm1704
  %v1706 = vsel %vm1705, %v1697, %v1702
  %v1707 = vrsqrt.pop %v1696
  %v1708 = vmul.f32 %v1707, %v1696
  %v1709 = vmul.f32 %v1708, %v1707
  %v1710 = vmul.f32 0.5, %v1709
  %v1711 = vsub.f32 1.5, %v1710
  %v1712 = vmul.f32 %v1707, %v1711
  %vm1713 = vweird.f32 %v1696
  %vm1714 = vweird.f32 %v1707
  %vm1715 = vmor %vm1713, %vm1714
  %v1716 = vsel %vm1715, %v1707, %v1712
  %v1717 = vmul.f32 %v1683, %v1706
  %v1718 = vmul.f32 %v1684, %v1716
  %v1720 = vperm.slane %v1673, 0
  %v1722 = vmul.f32 %v1717, %v1720
  %v1723 = vmul.f32 %v1718, %v1720
  %v1725 = vperm.slane %v1674, 0
  %v1727 = vadd.f32 %v1722, %v1725
  %v1728 = vadd.f32 %v1723, %v1725
  %v1729 = vld [vmem:[%s14] sm:$0xf]
  %v1730 = vld [vmem:[%s14 + $0x4] sm:$0xf]
  %v1731 = vld [vmem:[%s14 + $0x8] sm:$0xf]
  %v1732 = vld [vmem:[%s14 + $0xc] sm:$0xf]
  %v1733 = vpack.c.bf16 %v1728, %v1727
  %v1734 = vld [vmem:[%s15] sm:$0x1]
  %v1736 = vperm.slane %v1734, 0
  %v1742 = vunpack.c.l.b16 %v1729
  %v1743 = vunpack.c.l.b16 %v1730
  %v1744 = vunpack.c.l.b16 %v1731
  %v1745 = vunpack.c.l.b16 %v1732
  %v1746 = vpack.c.b16 %v1743, %v1742
  %v1747 = vpack.c.b16 %v1745, %v1744
  %v1751 = vsel %vm58, %v1733, 0
  %1753 = vmatpush.bf16.msra.mxu0 0
  %1754 = vmatpush.bf16.msra.mxu0 0
  %1755 = vmatpush.bf16.msra.mxu0 0
  %1756 = vmatpush.bf16.msra.mxu0 0
  %1757 = vmatpush.bf16.msra.mxu0 0
  %1758 = vmatpush.bf16.msra.mxu0 0
  %1759 = vmatpush.bf16.msra.mxu0 %v1747
  %1760 = vmatpush.bf16.msra.mxu0 %v1746
  %1761 = vmatmul.bf16.gmra.mxu0 %v1751
  %v1762 = vpop.f32.mrf.mxu0
  %v1763 = vadd.f32 %v1736, %v1762
  %v1764 = vpop.f32.mrf.mxu0
  %v1765 = vadd.f32 %v1736, %v1764
  %1766 = vdwg.mxu0
  %vm1767 = vcmask 23552
  %1768 = vst.msk [vmem:[%s16] sm:$0xff] %vm1767, %v1763
  %1769 = vst.msk [vmem:[%s16 + $0x8] sm:$0xff] %vm1767, %v1765
  // Predicated region
  $region66: #{poi_transformer_forward.1} parent=0 // pred_check
    _
  $region67: #{poi_transformer_forward.1} parent=0 // pred_check_branch
    %1771 = sbr.rel (0) target = $region69
  $region68: #{poi_transformer_forward.1} parent=0 // pred_region
    _
  $region69: #{poi_transformer_forward.1} parent=0 // pred_fallthru
    _
  // Predicated region
  $region70: #{poi_transformer_forward.1} parent=0 // pred_check
    _
  $region71: #{poi_transformer_forward.1} parent=0 // pred_check_branch
    %1773 = sbr.rel (0) target = $region73
  $region72: #{poi_transformer_forward.1} parent=0 // pred_region
    _
  $region73: #{poi_transformer_forward.1} parent=0 // pred_fallthru
    _

</llo_original>
